<compile_context>
chip_gen: v7x
topology: tpu7x:2x2x1
jax: 0.10.0
libtpu: 0.0.40
codegen_flags: <defaults>
</compile_context>

<pallas_src>
import jax
import jax.numpy as jnp
from jax.experimental import pallas as pl
from jax.experimental.pallas import tpu as pltpu

_LANE = 128      # vreg lane width
_SUBLANE = 8     # fp32 sublane width


def _round_up(x, m):
    return ((x + m - 1) // m) * m


def mlp_kernel(x_ref,
               w1_ref, b1_ref,
               w2_ref, b2_ref,
               w3_ref, b3_ref,
               w4_ref, b4_ref,
               o_ref):
    """Whole 4-layer MLP fused per batch tile.

    Matmuls accumulate in fp32 on the MXU; bias-add + ReLU stay in fp32 on the
    VPU (which has huge slack in this regime, and avoids bf16 VPU ops on v5e).
    """
    h = jnp.dot(x_ref[...], w1_ref[...], preferred_element_type=jnp.float32)
    h = jnp.maximum(h + b1_ref[...], 0.0)

    h = jnp.dot(h.astype(w2_ref.dtype), w2_ref[...],
                preferred_element_type=jnp.float32)
    h = jnp.maximum(h + b2_ref[...], 0.0)

    h = jnp.dot(h.astype(w3_ref.dtype), w3_ref[...],
                preferred_element_type=jnp.float32)
    h = jnp.maximum(h + b3_ref[...], 0.0)

    h = jnp.dot(h.astype(w4_ref.dtype), w4_ref[...],
                preferred_element_type=jnp.float32)
    o_ref[...] = (h + b4_ref[...]).astype(o_ref.dtype)


def _choose_tile_m(b_rows):
    """Largest batch tile up to 1024 rows, keeping >=2 grid steps when
    possible so both v7x TensorCores get work."""
    if b_rows <= 2 * _SUBLANE:
        return _SUBLANE
    tile = min(1024, _round_up(b_rows // 2, _SUBLANE))
    return max(_SUBLANE, tile)


def neural_network_forward(x, params, *, tile_m=None,
                           compute_dtype=jnp.float32):
    """x: [B, ndIn]; params: dict l1..l4 of (W [in,out], b [1,out])."""
    B, nd_in = x.shape
    w1, b1 = params["l1"]
    w2, b2 = params["l2"]
    w3, b3 = params["l3"]
    w4, b4 = params["l4"]
    n_neurons = w1.shape[1]
    nd_out = w4.shape[1]

    # ---- Lane-dense padding: hidden & output widths -> multiples of 128.
    # Zero columns/rows and zero biases leave the math unchanged (ReLU(0)=0).
    n_pad = _round_up(max(n_neurons, _LANE), _LANE)
    out_pad = _round_up(max(nd_out, _LANE), _LANE)

    def pad2(a, rows, cols, dtype):
        r, c = a.shape
        return jnp.pad(a, ((0, rows - r), (0, cols - c))).astype(dtype)

    w1p = pad2(w1, nd_in, n_pad, compute_dtype)
    w2p = pad2(w2, n_pad, n_pad, compute_dtype)
    w3p = pad2(w3, n_pad, n_pad, compute_dtype)
    w4p = pad2(w4, n_pad, out_pad, compute_dtype)
    b1p = pad2(b1, 1, n_pad, jnp.float32)
    b2p = pad2(b2, 1, n_pad, jnp.float32)
    b3p = pad2(b3, 1, n_pad, jnp.float32)
    b4p = pad2(b4, 1, out_pad, jnp.float32)

    # ---- Batch tiling: large tiles, pad batch up to a tile multiple.
    b_rows = _round_up(B, _SUBLANE)
    if tile_m is None:
        tile_m = _choose_tile_m(b_rows)
    assert tile_m % _SUBLANE == 0, "tile_m must be a multiple of 8 (fp32 sublane)"
    b_pad = _round_up(b_rows, tile_m)
    x_p = jnp.pad(x, ((0, b_pad - B), (0, 0))).astype(compute_dtype)
    grid = (b_pad // tile_m,)

    # ---- Explicit VMEM budget (stay well under v7x's 64 MiB physical cap).
    w_item = jnp.dtype(compute_dtype).itemsize
    weight_bytes = (w1p.size + w2p.size + w3p.size + w4p.size) * w_item
    bias_bytes = (b1p.size + b2p.size + b3p.size + b4p.size) * 4
    act_bytes = tile_m * (nd_in * w_item + out_pad * 4 + 2 * n_pad * 4)
    vmem_limit = int(min(48 * 1024 * 1024,
                         max(32 * 1024 * 1024,
                             4 * (weight_bytes + bias_bytes + act_bytes))))

    def make_call(single_buffer_weights):
        if single_buffer_weights:
            # Grid-invariant operands (constant index_map) only need 1 buffer.
            def wspec(r, c):
                return pl.BlockSpec((r, c), lambda i: (0, 0),
                                    pipeline_mode=pl.Buffered(buffer_count=1))
        else:
            def wspec(r, c):
                return pl.BlockSpec((r, c), lambda i: (0, 0))

        return pl.pallas_call(
            mlp_kernel,
            out_shape=jax.ShapeDtypeStruct((b_pad, out_pad), jnp.float32),
            grid_spec=pltpu.PrefetchScalarGridSpec(
                num_scalar_prefetch=0,
                grid=grid,
                in_specs=[
                    pl.BlockSpec((tile_m, nd_in), lambda i: (i, 0)),   # x tile
                    wspec(nd_in, n_pad),  wspec(1, n_pad),             # layer 1
                    wspec(n_pad, n_pad),  wspec(1, n_pad),             # layer 2
                    wspec(n_pad, n_pad),  wspec(1, n_pad),             # layer 3
                    wspec(n_pad, out_pad), wspec(1, out_pad),          # layer 4
                ],
                out_specs=pl.BlockSpec((tile_m, out_pad), lambda i: (i, 0)),
            ),
            compiler_params=pltpu.CompilerParams(
                dimension_semantics=("parallel",),
                vmem_limit_bytes=vmem_limit),
        )

    args = (x_p, w1p, b1p, w2p, b2p, w3p, b3p, w4p, b4p)
    try:
        out = make_call(True)(*args)
    except Exception:
        # Fallback for JAX versions that reject pipeline_mode / Buffered(1).
        out = make_call(False)(*args)

    # Slice away batch and lane padding.
    return out[:B, :nd_out].astype(x.dtype)


def init_params(key, nd_in, nd_out, n_neurons):
    """PyTorch nn.Linear-style init (uniform +-1/sqrt(fan_in)).
    Weights stored [in, out] (transposed vs torch), biases [1, out]."""
    dims = [(nd_in, n_neurons), (n_neurons, n_neurons),
            (n_neurons, n_neurons), (n_neurons, nd_out)]
    params = {}
    for idx, (fan_in, fan_out) in enumerate(dims, start=1):
        key, kw, kb = jax.random.split(key, 3)
        bound = 1.0 / jnp.sqrt(fan_in)
        w = jax.random.uniform(kw, (fan_in, fan_out), jnp.float32,
                               minval=-bound, maxval=bound)
        b = jax.random.uniform(kb, (1, fan_out), jnp.float32,
                               minval=-bound, maxval=bound)
        params[f"l{idx}"] = (w, b)
    return params


def reference_forward(x, params):
    h = x
    for name in ("l1", "l2", "l3"):
        w, b = params[name]
        h = jnp.maximum(h @ w + b, 0.0)
    w, b = params["l4"]
    return h @ w + b


if __name__ == "__main__":
    # Small shapes consistent with the module: inputDim=4, outputDim=2,
    # numNeurons=32, batch=16.
    nd_in, nd_out, n_neurons, batch = 4, 2, 32, 16

    key = jax.random.PRNGKey(0)
    key, kx = jax.random.split(key)
    x = jax.random.normal(kx, (batch, nd_in), jnp.float32)
    params = init_params(key, nd_in, nd_out, n_neurons)

    y = neural_network_forward(x, params)
    y = jax.block_until_ready(y)

    y_ref = reference_forward(x, params)
    assert y.shape == (batch, nd_out)
    assert jnp.allclose(y, y_ref, atol=1e-5, rtol=1e-5), "mismatch vs reference"

    print("KERNEL_OK")
</pallas_src>

<mosaic_0001>
module attributes {stable_mosaic.version = 11 : i64} {
  func.func @mlp_kernel(%arg0: i32, %arg1: memref<8x4xf32, #tpu.memory_space<vmem>>, %arg2: memref<4x128xf32, #tpu.memory_space<vmem>>, %arg3: memref<1x128xf32, #tpu.memory_space<vmem>>, %arg4: memref<128x128xf32, #tpu.memory_space<vmem>>, %arg5: memref<1x128xf32, #tpu.memory_space<vmem>>, %arg6: memref<128x128xf32, #tpu.memory_space<vmem>>, %arg7: memref<1x128xf32, #tpu.memory_space<vmem>>, %arg8: memref<128x128xf32, #tpu.memory_space<vmem>>, %arg9: memref<1x128xf32, #tpu.memory_space<vmem>>, %arg10: memref<8x128xf32, #tpu.memory_space<vmem>>) attributes {dimension_semantics = [#tpu.dimension_semantics<parallel>], iteration_bounds = array<i64: 2>, scalar_prefetch = 0 : i64, scratch_operands = 0 : i64, tpu.core_type = #tpu.core_type<tc>, window_params = [{transform_indices = @transform_0, window_bounds = array<i64: 8, 4>}, {pipeline_mode = #tpu.pipeline_mode<synchronous>, transform_indices = @transform_1, window_bounds = array<i64: 4, 128>}, {pipeline_mode = #tpu.pipeline_mode<synchronous>, transform_indices = @transform_2, window_bounds = array<i64: 1, 128>}, {pipeline_mode = #tpu.pipeline_mode<synchronous>, transform_indices = @transform_3, window_bounds = array<i64: 128, 128>}, {pipeline_mode = #tpu.pipeline_mode<synchronous>, transform_indices = @transform_4, window_bounds = array<i64: 1, 128>}, {pipeline_mode = #tpu.pipeline_mode<synchronous>, transform_indices = @transform_5, window_bounds = array<i64: 128, 128>}, {pipeline_mode = #tpu.pipeline_mode<synchronous>, transform_indices = @transform_6, window_bounds = array<i64: 1, 128>}, {pipeline_mode = #tpu.pipeline_mode<synchronous>, transform_indices = @transform_7, window_bounds = array<i64: 128, 128>}, {pipeline_mode = #tpu.pipeline_mode<synchronous>, transform_indices = @transform_8, window_bounds = array<i64: 1, 128>}, {transform_indices = @transform_9, window_bounds = array<i64: 8, 128>}]} {
    %c0 = arith.constant 0 : index
    %c0_0 = arith.constant 0 : index
    %0 = vector.load %arg1[%c0, %c0_0] : memref<8x4xf32, #tpu.memory_space<vmem>>, vector<8x4xf32>
    %c0_1 = arith.constant 0 : index
    %c0_2 = arith.constant 0 : index
    %1 = vector.load %arg2[%c0_1, %c0_2] : memref<4x128xf32, #tpu.memory_space<vmem>>, vector<4x128xf32>
    %cst = arith.constant dense<0.000000e+00> : vector<8x128xf32>
    %2 = tpu.matmul %0, %1, %cst {dimension_numbers = #tpu.dot_dimension_numbers<[1], [0], [0], [1], [0, 0, 1, 1], [], []>} : vector<8x4xf32>, vector<4x128xf32>, vector<8x128xf32> -> vector<8x128xf32>
    %c0_3 = arith.constant 0 : index
    %c0_4 = arith.constant 0 : index
    %3 = vector.load %arg3[%c0_3, %c0_4] : memref<1x128xf32, #tpu.memory_space<vmem>>, vector<1x128xf32>
    %4 = vector.broadcast %3 : vector<1x128xf32> to vector<8x128xf32>
    %5 = arith.addf %2, %4 : vector<8x128xf32>
    %cst_5 = arith.constant 0.000000e+00 : f32
    %6 = vector.broadcast %cst_5 : f32 to vector<8x128xf32>
    %7 = arith.maximumf %5, %6 : vector<8x128xf32>
    %c0_6 = arith.constant 0 : index
    %c0_7 = arith.constant 0 : index
    %8 = vector.load %arg4[%c0_6, %c0_7] : memref<128x128xf32, #tpu.memory_space<vmem>>, vector<128x128xf32>
    %cst_8 = arith.constant dense<0.000000e+00> : vector<8x128xf32>
    %9 = tpu.matmul %7, %8, %cst_8 {dimension_numbers = #tpu.dot_dimension_numbers<[1], [0], [0], [1], [0, 0, 1, 1], [], []>} : vector<8x128xf32>, vector<128x128xf32>, vector<8x128xf32> -> vector<8x128xf32>
    %c0_9 = arith.constant 0 : index
    %c0_10 = arith.constant 0 : index
    %10 = vector.load %arg5[%c0_9, %c0_10] : memref<1x128xf32, #tpu.memory_space<vmem>>, vector<1x128xf32>
    %11 = vector.broadcast %10 : vector<1x128xf32> to vector<8x128xf32>
    %12 = arith.addf %9, %11 : vector<8x128xf32>
    %cst_11 = arith.constant 0.000000e+00 : f32
    %13 = vector.broadcast %cst_11 : f32 to vector<8x128xf32>
    %14 = arith.maximumf %12, %13 : vector<8x128xf32>
    %c0_12 = arith.constant 0 : index
    %c0_13 = arith.constant 0 : index
    %15 = vector.load %arg6[%c0_12, %c0_13] : memref<128x128xf32, #tpu.memory_space<vmem>>, vector<128x128xf32>
    %cst_14 = arith.constant dense<0.000000e+00> : vector<8x128xf32>
    %16 = tpu.matmul %14, %15, %cst_14 {dimension_numbers = #tpu.dot_dimension_numbers<[1], [0], [0], [1], [0, 0, 1, 1], [], []>} : vector<8x128xf32>, vector<128x128xf32>, vector<8x128xf32> -> vector<8x128xf32>
    %c0_15 = arith.constant 0 : index
    %c0_16 = arith.constant 0 : index
    %17 = vector.load %arg7[%c0_15, %c0_16] : memref<1x128xf32, #tpu.memory_space<vmem>>, vector<1x128xf32>
    %18 = vector.broadcast %17 : vector<1x128xf32> to vector<8x128xf32>
    %19 = arith.addf %16, %18 : vector<8x128xf32>
    %cst_17 = arith.constant 0.000000e+00 : f32
    %20 = vector.broadcast %cst_17 : f32 to vector<8x128xf32>
    %21 = arith.maximumf %19, %20 : vector<8x128xf32>
    %c0_18 = arith.constant 0 : index
    %c0_19 = arith.constant 0 : index
    %22 = vector.load %arg8[%c0_18, %c0_19] : memref<128x128xf32, #tpu.memory_space<vmem>>, vector<128x128xf32>
    %cst_20 = arith.constant dense<0.000000e+00> : vector<8x128xf32>
    %23 = tpu.matmul %21, %22, %cst_20 {dimension_numbers = #tpu.dot_dimension_numbers<[1], [0], [0], [1], [0, 0, 1, 1], [], []>} : vector<8x128xf32>, vector<128x128xf32>, vector<8x128xf32> -> vector<8x128xf32>
    %c0_21 = arith.constant 0 : index
    %c0_22 = arith.constant 0 : index
    %24 = vector.load %arg9[%c0_21, %c0_22] : memref<1x128xf32, #tpu.memory_space<vmem>>, vector<1x128xf32>
    %25 = vector.broadcast %24 : vector<1x128xf32> to vector<8x128xf32>
    %26 = arith.addf %23, %25 : vector<8x128xf32>
    %c0_23 = arith.constant 0 : index
    %c0_24 = arith.constant 0 : index
    %27 = vector.load %arg10[%c0_23, %c0_24] : memref<8x128xf32, #tpu.memory_space<vmem>>, vector<8x128xf32>
    tpu.vector_store %arg10[%c0_23, %c0_24], %26 {strides = array<i32>} : memref<8x128xf32, #tpu.memory_space<vmem>>, vector<8x128xf32>,
    return
  }
  func.func @transform_0(%arg0: i32) -> (i32, i32) {
    %c0_i32 = arith.constant 0 : i32
    %c0_i32_0 = arith.constant 0 : i32
    return %arg0, %c0_i32 : i32, i32
  }
  func.func @transform_1(%arg0: i32) -> (i32, i32) {
    %c0_i32 = arith.constant 0 : i32
    %c0_i32_0 = arith.constant 0 : i32
    %c0_i32_1 = arith.constant 0 : i32
    return %c0_i32, %c0_i32_0 : i32, i32
  }
  func.func @transform_2(%arg0: i32) -> (i32, i32) {
    %c0_i32 = arith.constant 0 : i32
    %c0_i32_0 = arith.constant 0 : i32
    %c0_i32_1 = arith.constant 0 : i32
    return %c0_i32, %c0_i32_0 : i32, i32
  }
  func.func @transform_3(%arg0: i32) -> (i32, i32) {
    %c0_i32 = arith.constant 0 : i32
    %c0_i32_0 = arith.constant 0 : i32
    %c0_i32_1 = arith.constant 0 : i32
    return %c0_i32, %c0_i32_0 : i32, i32
  }
  func.func @transform_4(%arg0: i32) -> (i32, i32) {
    %c0_i32 = arith.constant 0 : i32
    %c0_i32_0 = arith.constant 0 : i32
    %c0_i32_1 = arith.constant 0 : i32
    return %c0_i32, %c0_i32_0 : i32, i32
  }
  func.func @transform_5(%arg0: i32) -> (i32, i32) {
    %c0_i32 = arith.constant 0 : i32
    %c0_i32_0 = arith.constant 0 : i32
    %c0_i32_1 = arith.constant 0 : i32
    return %c0_i32, %c0_i32_0 : i32, i32
  }
  func.func @transform_6(%arg0: i32) -> (i32, i32) {
    %c0_i32 = arith.constant 0 : i32
    %c0_i32_0 = arith.constant 0 : i32
    %c0_i32_1 = arith.constant 0 : i32
    return %c0_i32, %c0_i32_0 : i32, i32
  }
  func.func @transform_7(%arg0: i32) -> (i32, i32) {
    %c0_i32 = arith.constant 0 : i32
    %c0_i32_0 = arith.constant 0 : i32
    %c0_i32_1 = arith.constant 0 : i32
    return %c0_i32, %c0_i32_0 : i32, i32
  }
  func.func @transform_8(%arg0: i32) -> (i32, i32) {
    %c0_i32 = arith.constant 0 : i32
    %c0_i32_0 = arith.constant 0 : i32
    %c0_i32_1 = arith.constant 0 : i32
    return %c0_i32, %c0_i32_0 : i32, i32
  }
  func.func @transform_9(%arg0: i32) -> (i32, i32) {
    %c0_i32 = arith.constant 0 : i32
    %c0_i32_0 = arith.constant 0 : i32
    return %arg0, %c0_i32 : i32, i32
  }
}

module attributes {stable_mosaic.version = 11 : i64} {
  func.func @mlp_kernel(%arg0: i32, %arg1: memref<8x4xf32, #tpu.memory_space<vmem>>, %arg2: memref<4x128xf32, #tpu.memory_space<vmem>>, %arg3: memref<1x128xf32, #tpu.memory_space<vmem>>, %arg4: memref<128x128xf32, #tpu.memory_space<vmem>>, %arg5: memref<1x128xf32, #tpu.memory_space<vmem>>, %arg6: memref<128x128xf32, #tpu.memory_space<vmem>>, %arg7: memref<1x128xf32, #tpu.memory_space<vmem>>, %arg8: memref<128x128xf32, #tpu.memory_space<vmem>>, %arg9: memref<1x128xf32, #tpu.memory_space<vmem>>, %arg10: memref<8x128xf32, #tpu.memory_space<vmem>>) attributes {dimension_semantics = [#tpu.dimension_semantics<parallel>], iteration_bounds = array<i64: 2>, scalar_prefetch = 0 : i64, scratch_operands = 0 : i64, tpu.core_type = #tpu.core_type<tc>, window_params = [{transform_indices = @transform_0, window_bounds = array<i64: 8, 4>}, {pipeline_mode = #tpu.pipeline_mode<synchronous>, transform_indices = @transform_1, window_bounds = array<i64: 4, 128>}, {pipeline_mode = #tpu.pipeline_mode<synchronous>, transform_indices = @transform_2, window_bounds = array<i64: 1, 128>}, {pipeline_mode = #tpu.pipeline_mode<synchronous>, transform_indices = @transform_3, window_bounds = array<i64: 128, 128>}, {pipeline_mode = #tpu.pipeline_mode<synchronous>, transform_indices = @transform_4, window_bounds = array<i64: 1, 128>}, {pipeline_mode = #tpu.pipeline_mode<synchronous>, transform_indices = @transform_5, window_bounds = array<i64: 128, 128>}, {pipeline_mode = #tpu.pipeline_mode<synchronous>, transform_indices = @transform_6, window_bounds = array<i64: 1, 128>}, {pipeline_mode = #tpu.pipeline_mode<synchronous>, transform_indices = @transform_7, window_bounds = array<i64: 128, 128>}, {pipeline_mode = #tpu.pipeline_mode<synchronous>, transform_indices = @transform_8, window_bounds = array<i64: 1, 128>}, {transform_indices = @transform_9, window_bounds = array<i64: 8, 128>}]} {
    %c0 = arith.constant 0 : index
    %c0_0 = arith.constant 0 : index
    %0 = vector.load %arg1[%c0, %c0_0] : memref<8x4xf32, #tpu.memory_space<vmem>>, vector<8x4xf32>
    %c0_1 = arith.constant 0 : index
    %c0_2 = arith.constant 0 : index
    %1 = vector.load %arg2[%c0_1, %c0_2] : memref<4x128xf32, #tpu.memory_space<vmem>>, vector<4x128xf32>
    %cst = arith.constant dense<0.000000e+00> : vector<8x128xf32>
    %2 = tpu.matmul %0, %1, %cst {dimension_numbers = #tpu.dot_dimension_numbers<[1], [0], [0], [1], [0, 0, 1, 1], [], []>} : vector<8x4xf32>, vector<4x128xf32>, vector<8x128xf32> -> vector<8x128xf32>
    %c0_3 = arith.constant 0 : index
    %c0_4 = arith.constant 0 : index
    %3 = vector.load %arg3[%c0_3, %c0_4] : memref<1x128xf32, #tpu.memory_space<vmem>>, vector<1x128xf32>
    %4 = vector.broadcast %3 : vector<1x128xf32> to vector<8x128xf32>
    %5 = arith.addf %2, %4 : vector<8x128xf32>
    %cst_5 = arith.constant 0.000000e+00 : f32
    %6 = vector.broadcast %cst_5 : f32 to vector<8x128xf32>
    %7 = arith.maximumf %5, %6 : vector<8x128xf32>
    %c0_6 = arith.constant 0 : index
    %c0_7 = arith.constant 0 : index
    %8 = vector.load %arg4[%c0_6, %c0_7] : memref<128x128xf32, #tpu.memory_space<vmem>>, vector<128x128xf32>
    %cst_8 = arith.constant dense<0.000000e+00> : vector<8x128xf32>
    %9 = tpu.matmul %7, %8, %cst_8 {dimension_numbers = #tpu.dot_dimension_numbers<[1], [0], [0], [1], [0, 0, 1, 1], [], []>} : vector<8x128xf32>, vector<128x128xf32>, vector<8x128xf32> -> vector<8x128xf32>
    %c0_9 = arith.constant 0 : index
    %c0_10 = arith.constant 0 : index
    %10 = vector.load %arg5[%c0_9, %c0_10] : memref<1x128xf32, #tpu.memory_space<vmem>>, vector<1x128xf32>
    %11 = vector.broadcast %10 : vector<1x128xf32> to vector<8x128xf32>
    %12 = arith.addf %9, %11 : vector<8x128xf32>
    %cst_11 = arith.constant 0.000000e+00 : f32
    %13 = vector.broadcast %cst_11 : f32 to vector<8x128xf32>
    %14 = arith.maximumf %12, %13 : vector<8x128xf32>
    %c0_12 = arith.constant 0 : index
    %c0_13 = arith.constant 0 : index
    %15 = vector.load %arg6[%c0_12, %c0_13] : memref<128x128xf32, #tpu.memory_space<vmem>>, vector<128x128xf32>
    %cst_14 = arith.constant dense<0.000000e+00> : vector<8x128xf32>
    %16 = tpu.matmul %14, %15, %cst_14 {dimension_numbers = #tpu.dot_dimension_numbers<[1], [0], [0], [1], [0, 0, 1, 1], [], []>} : vector<8x128xf32>, vector<128x128xf32>, vector<8x128xf32> -> vector<8x128xf32>
    %c0_15 = arith.constant 0 : index
    %c0_16 = arith.constant 0 : index
    %17 = vector.load %arg7[%c0_15, %c0_16] : memref<1x128xf32, #tpu.memory_space<vmem>>, vector<1x128xf32>
    %18 = vector.broadcast %17 : vector<1x128xf32> to vector<8x128xf32>
    %19 = arith.addf %16, %18 : vector<8x128xf32>
    %cst_17 = arith.constant 0.000000e+00 : f32
    %20 = vector.broadcast %cst_17 : f32 to vector<8x128xf32>
    %21 = arith.maximumf %19, %20 : vector<8x128xf32>
    %c0_18 = arith.constant 0 : index
    %c0_19 = arith.constant 0 : index
    %22 = vector.load %arg8[%c0_18, %c0_19] : memref<128x128xf32, #tpu.memory_space<vmem>>, vector<128x128xf32>
    %cst_20 = arith.constant dense<0.000000e+00> : vector<8x128xf32>
    %23 = tpu.matmul %21, %22, %cst_20 {dimension_numbers = #tpu.dot_dimension_numbers<[1], [0], [0], [1], [0, 0, 1, 1], [], []>} : vector<8x128xf32>, vector<128x128xf32>, vector<8x128xf32> -> vector<8x128xf32>
    %c0_21 = arith.constant 0 : index
    %c0_22 = arith.constant 0 : index
    %24 = vector.load %arg9[%c0_21, %c0_22] : memref<1x128xf32, #tpu.memory_space<vmem>>, vector<1x128xf32>
    %25 = vector.broadcast %24 : vector<1x128xf32> to vector<8x128xf32>
    %26 = arith.addf %23, %25 : vector<8x128xf32>
    %c0_23 = arith.constant 0 : index
    %c0_24 = arith.constant 0 : index
    %27 = vector.load %arg10[%c0_23, %c0_24] : memref<8x128xf32, #tpu.memory_space<vmem>>, vector<8x128xf32>
    tpu.vector_store %arg10[%c0_23, %c0_24], %26 {strides = array<i32>} : memref<8x128xf32, #tpu.memory_space<vmem>>, vector<8x128xf32>,
    return
  }
  func.func @transform_0(%arg0: i32) -> (i32, i32) {
    %c0_i32 = arith.constant 0 : i32
    %c0_i32_0 = arith.constant 0 : i32
    return %arg0, %c0_i32 : i32, i32
  }
  func.func @transform_1(%arg0: i32) -> (i32, i32) {
    %c0_i32 = arith.constant 0 : i32
    %c0_i32_0 = arith.constant 0 : i32
    %c0_i32_1 = arith.constant 0 : i32
    return %c0_i32, %c0_i32_0 : i32, i32
  }
  func.func @transform_2(%arg0: i32) -> (i32, i32) {
    %c0_i32 = arith.constant 0 : i32
    %c0_i32_0 = arith.constant 0 : i32
    %c0_i32_1 = arith.constant 0 : i32
    return %c0_i32, %c0_i32_0 : i32, i32
  }
  func.func @transform_3(%arg0: i32) -> (i32, i32) {
    %c0_i32 = arith.constant 0 : i32
    %c0_i32_0 = arith.constant 0 : i32
    %c0_i32_1 = arith.constant 0 : i32
    return %c0_i32, %c0_i32_0 : i32, i32
  }
  func.func @transform_4(%arg0: i32) -> (i32, i32) {
    %c0_i32 = arith.constant 0 : i32
    %c0_i32_0 = arith.constant 0 : i32
    %c0_i32_1 = arith.constant 0 : i32
    return %c0_i32, %c0_i32_0 : i32, i32
  }
  func.func @transform_5(%arg0: i32) -> (i32, i32) {
    %c0_i32 = arith.constant 0 : i32
    %c0_i32_0 = arith.constant 0 : i32
    %c0_i32_1 = arith.constant 0 : i32
    return %c0_i32, %c0_i32_0 : i32, i32
  }
  func.func @transform_6(%arg0: i32) -> (i32, i32) {
    %c0_i32 = arith.constant 0 : i32
    %c0_i32_0 = arith.constant 0 : i32
    %c0_i32_1 = arith.constant 0 : i32
    return %c0_i32, %c0_i32_0 : i32, i32
  }
  func.func @transform_7(%arg0: i32) -> (i32, i32) {
    %c0_i32 = arith.constant 0 : i32
    %c0_i32_0 = arith.constant 0 : i32
    %c0_i32_1 = arith.constant 0 : i32
    return %c0_i32, %c0_i32_0 : i32, i32
  }
  func.func @transform_8(%arg0: i32) -> (i32, i32) {
    %c0_i32 = arith.constant 0 : i32
    %c0_i32_0 = arith.constant 0 : i32
    %c0_i32_1 = arith.constant 0 : i32
    return %c0_i32, %c0_i32_0 : i32, i32
  }
  func.func @transform_9(%arg0: i32) -> (i32, i32) {
    %c0_i32 = arith.constant 0 : i32
    %c0_i32_0 = arith.constant 0 : i32
    return %arg0, %c0_i32 : i32, i32
  }
}

</mosaic_0001>

<llo_original>
// kernel: tpu_custom_call.1
$region0: #{tpu_custom_call.1}
  #allocation0 [shape = 'u32[]', space=smem, size = 0x4, offset = 0x4, fixed_abs, tag = 'smem constant byte address 0x4 - core index']
  #allocation1 [shape = 'u32[144,128]{1,0:T(1,128)}', space=vmem, size = 0x12000, scoped, tag = 'internal scratch']
  %s0 = inlined_call_operand.vmem [shape: f32[16,4], index: 0, kind: input, shape index: {}]
  %s1 = inlined_call_operand.vmem [shape: f32[4,128], index: 1, kind: input, shape index: {}]
  %s2 = inlined_call_operand.vmem [shape: f32[1,128], index: 2, kind: input, shape index: {}]
  %s3 = inlined_call_operand.hbm [shape: f32[128,128], index: 3, kind: input, shape index: {}]
  %s4 = inlined_call_operand.vmem [shape: f32[1,128], index: 4, kind: input, shape index: {}]
  %s5 = inlined_call_operand.hbm [shape: f32[128,128], index: 5, kind: input, shape index: {}]
  %s6 = inlined_call_operand.vmem [shape: f32[1,128], index: 6, kind: input, shape index: {}]
  %s7 = inlined_call_operand.hbm [shape: f32[128,128], index: 7, kind: input, shape index: {}]
  %s8 = inlined_call_operand.vmem [shape: f32[1,128], index: 8, kind: input, shape index: {}]
  %s9 = inlined_call_operand.hbm [shape: f32[16,128], index: 9, kind: output, shape index: {}]
  %s10 = sld [smem:[#allocation0]]
  $region81: #{tpu_custom_call.1} parent=0
    _
  %s12 = ssub.s32 1, %s10
  %s13 = scalar_select 0, %s12, %s10
  $region1: #{tpu_custom_call.1} parent=0
    #allocation2 [shape = 'u8[65536]{0}', space=vmem, size = 0x10000, scoped, tag = 'input window, operand 3, single buffered']
    #allocation3 [shape = 's32[2]{0}', space=sflag, size = 0x8, scoped, tag = 'scoped memory for tpu_custom_call.1']
    #allocation4 [shape = 's32[2]{0}', space=sflag, size = 0x8, scoped, tag = 'scoped memory for tpu_custom_call.1']
    #allocation5 [shape = 'u8[65536]{0}', space=vmem, size = 0x10000, scoped, tag = 'input window, operand 5, single buffered']
    #allocation6 [shape = 's32[1]{0}', space=sflag, size = 0x4, scoped, tag = 'scoped memory for tpu_custom_call.1']
    #allocation7 [shape = 'u8[65536]{0}', space=vmem, size = 0x10000, scoped, tag = 'input window, operand 7, single buffered']
    #allocation8 [shape = 'u8[8192]{0}', space=vmem, size = 0x2000, scoped, tag = 'output window, operand 0']
    %14 = vsyncpa [#allocation3], 0
    %15 = vsyncpa [#allocation6], 0
    %16 = vsyncpa [#allocation4], 0
    %s17 = scalar_lea.sflag [#allocation4], 1
    %18 = vsyncpa %s17, 0
    loop: start=0, step=1, limit=4
    $region2: #{tpu_custom_call.1} parent=1 // loop_pre_header
      _
    $region3: #{tpu_custom_call.1} parent=1 // loop_header
      %s20 = sphi 0, %s24
      %p21 = scmp.ge.s32.totalorder %s20, 4
      %s30 = sphi 0, %s32
      %s33 = sphi 0, %s30
      %s34 = sphi 0, %s33
      %s50 = sphi 0, %s34
      %s54 = sphi 0, %s54
      %s56 = sphi 0, %s54
      %s57 = sphi 0, %s56
      %s71 = sphi 0, %s57
      %s75 = sphi 0, %s75
      %s77 = sphi 0, %s75
      %s78 = sphi 0, %s77
      %s92 = sphi 0, %s78
      %s96 = sphi 0, %s96
      %s98 = sphi 0, %s96
      %s99 = sphi 0, %s98
      %s113 = sphi 0, %s99
      %s117 = sphi 0, %s117
      %s119 = sphi 0, %s117
      %s120 = sphi 0, %s119
      %s134 = sphi 0, %s120
      %s138 = sphi 0, %s138
      %s140 = sphi 0, %s138
      %s141 = sphi 0, %s140
      %s155 = sphi 0, %s141
      %s159 = sphi 0, %s159
      %s161 = sphi 0, %s159
      %s162 = sphi 0, %s161
      %s176 = sphi 0, %s162
      %s180 = sphi 0, %s180
      %s182 = sphi 0, %s180
      %s183 = sphi 0, %s182
      %s197 = sphi 0, %s183
      %s201 = sphi 0, %s201
      %s203 = sphi 0, %s201
      %s204 = sphi 0, %s203
      %s218 = sphi 0, %s204
      %s224 = sphi 0, %s226
      %s227 = sphi 0, %s224
      %s228 = sphi 0, %s227
      %s244 = sphi 0, %s228
    $region4: #{tpu_custom_call.1} parent=1 // loop_header_branch
      %23 = sbr.rel (%p21) target = $region8
    $region5: #{tpu_custom_call.1} parent=1 // loop_body
      %s25 = ssub.s32 %s20, 1
      %s26 = ssub.s32 %s20, 2
      %s27 = sadd.s32 %s20, 1
      %s28 = ssub.s32 %s20, %s27
      %p29 = scmp.eq.s32.totalorder %s28, 0
      %s31 = sadd.s32 %s30, 1
      %s32 = scalar_select %p29, %s30, %s31
      %p35 = pneg %p29
      %p36 = scmp.eq.s32.totalorder %s20, 1
      %p37 = por %p35, %p36
      %p38 = scmp.ne.s32.totalorder %s30, %s33
      %p39 = scmp.eq.s32.totalorder %s20, 0
      %p40 = por %p38, %p39
      %p41 = scmp.ne.s32.totalorder %s30, %s33
      %p42 = scmp.eq.s32.totalorder %s25, 1
      %p43 = por %p41, %p42
      %p44 = scmp.ne.s32.totalorder %s33, %s34
      %p45 = scmp.eq.s32.totalorder %s25, 0
      %p46 = por %p44, %p45
      %p47 = scmp.ne.s32.totalorder %s33, %s34
      %p48 = scmp.eq.s32.totalorder %s26, 1
      %p49 = por %p47, %p48
      %p51 = scmp.ne.s32.totalorder %s34, %s50
      %p52 = scmp.eq.s32.totalorder %s26, 0
      %p53 = por %p51, %p52
      %s55 = sadd.s32 %s54, 1
      %p58 = scmp.eq.s32.totalorder %s20, 1
      %p59 = scmp.ne.s32.totalorder %s54, %s56
      %p60 = scmp.eq.s32.totalorder %s20, 0
      %p61 = por %p59, %p60
      %p62 = scmp.ne.s32.totalorder %s54, %s56
      %p63 = scmp.eq.s32.totalorder %s25, 1
      %p64 = por %p62, %p63
      %p65 = scmp.ne.s32.totalorder %s56, %s57
      %p66 = scmp.eq.s32.totalorder %s25, 0
      %p67 = por %p65, %p66
      %p68 = scmp.ne.s32.totalorder %s56, %s57
      %p69 = scmp.eq.s32.totalorder %s26, 1
      %p70 = por %p68, %p69
      %p72 = scmp.ne.s32.totalorder %s57, %s71
      %p73 = scmp.eq.s32.totalorder %s26, 0
      %p74 = por %p72, %p73
      %s76 = sadd.s32 %s75, 1
      %p79 = scmp.eq.s32.totalorder %s20, 1
      %p80 = scmp.ne.s32.totalorder %s75, %s77
      %p81 = scmp.eq.s32.totalorder %s20, 0
      %p82 = por %p80, %p81
      %p83 = scmp.ne.s32.totalorder %s75, %s77
      %p84 = scmp.eq.s32.totalorder %s25, 1
      %p85 = por %p83, %p84
      %p86 = scmp.ne.s32.totalorder %s77, %s78
      %p87 = scmp.eq.s32.totalorder %s25, 0
      %p88 = por %p86, %p87
      %p89 = scmp.ne.s32.totalorder %s77, %s78
      %p90 = scmp.eq.s32.totalorder %s26, 1
      %p91 = por %p89, %p90
      %p93 = scmp.ne.s32.totalorder %s78, %s92
      %p94 = scmp.eq.s32.totalorder %s26, 0
      %p95 = por %p93, %p94
      %s97 = sadd.s32 %s96, 1
      %p100 = scmp.eq.s32.totalorder %s20, 1
      %p101 = scmp.ne.s32.totalorder %s96, %s98
      %p102 = scmp.eq.s32.totalorder %s20, 0
      %p103 = por %p101, %p102
      %p104 = scmp.ne.s32.totalorder %s96, %s98
      %p105 = scmp.eq.s32.totalorder %s25, 1
      %p106 = por %p104, %p105
      %p107 = scmp.ne.s32.totalorder %s98, %s99
      %p108 = scmp.eq.s32.totalorder %s25, 0
      %p109 = por %p107, %p108
      %p110 = scmp.ne.s32.totalorder %s98, %s99
      %p111 = scmp.eq.s32.totalorder %s26, 1
      %p112 = por %p110, %p111
      %p114 = scmp.ne.s32.totalorder %s99, %s113
      %p115 = scmp.eq.s32.totalorder %s26, 0
      %p116 = por %p114, %p115
      %s118 = sadd.s32 %s117, 1
      %p121 = scmp.eq.s32.totalorder %s20, 1
      %p122 = scmp.ne.s32.totalorder %s117, %s119
      %p123 = scmp.eq.s32.totalorder %s20, 0
      %p124 = por %p122, %p123
      %p125 = scmp.ne.s32.totalorder %s117, %s119
      %p126 = scmp.eq.s32.totalorder %s25, 1
      %p127 = por %p125, %p126
      %p128 = scmp.ne.s32.totalorder %s119, %s120
      %p129 = scmp.eq.s32.totalorder %s25, 0
      %p130 = por %p128, %p129
      %p131 = scmp.ne.s32.totalorder %s119, %s120
      %p132 = scmp.eq.s32.totalorder %s26, 1
      %p133 = por %p131, %p132
      %p135 = scmp.ne.s32.totalorder %s120, %s134
      %p136 = scmp.eq.s32.totalorder %s26, 0
      %p137 = por %p135, %p136
      %s139 = sadd.s32 %s138, 1
      %p142 = scmp.eq.s32.totalorder %s20, 1
      %p143 = scmp.ne.s32.totalorder %s138, %s140
      %p144 = scmp.eq.s32.totalorder %s20, 0
      %p145 = por %p143, %p144
      %p146 = scmp.ne.s32.totalorder %s138, %s140
      %p147 = scmp.eq.s32.totalorder %s25, 1
      %p148 = por %p146, %p147
      %p149 = scmp.ne.s32.totalorder %s140, %s141
      %p150 = scmp.eq.s32.totalorder %s25, 0
      %p151 = por %p149, %p150
      %p152 = scmp.ne.s32.totalorder %s140, %s141
      %p153 = scmp.eq.s32.totalorder %s26, 1
      %p154 = por %p152, %p153
      %p156 = scmp.ne.s32.totalorder %s141, %s155
      %p157 = scmp.eq.s32.totalorder %s26, 0
      %p158 = por %p156, %p157
      %s160 = sadd.s32 %s159, 1
      %p163 = scmp.eq.s32.totalorder %s20, 1
      %p164 = scmp.ne.s32.totalorder %s159, %s161
      %p165 = scmp.eq.s32.totalorder %s20, 0
      %p166 = por %p164, %p165
      %p167 = scmp.ne.s32.totalorder %s159, %s161
      %p168 = scmp.eq.s32.totalorder %s25, 1
      %p169 = por %p167, %p168
      %p170 = scmp.ne.s32.totalorder %s161, %s162
      %p171 = scmp.eq.s32.totalorder %s25, 0
      %p172 = por %p170, %p171
      %p173 = scmp.ne.s32.totalorder %s161, %s162
      %p174 = scmp.eq.s32.totalorder %s26, 1
      %p175 = por %p173, %p174
      %p177 = scmp.ne.s32.totalorder %s162, %s176
      %p178 = scmp.eq.s32.totalorder %s26, 0
      %p179 = por %p177, %p178
      %s181 = sadd.s32 %s180, 1
      %p184 = scmp.eq.s32.totalorder %s20, 1
      %p185 = scmp.ne.s32.totalorder %s180, %s182
      %p186 = scmp.eq.s32.totalorder %s20, 0
      %p187 = por %p185, %p186
      %p188 = scmp.ne.s32.totalorder %s180, %s182
      %p189 = scmp.eq.s32.totalorder %s25, 1
      %p190 = por %p188, %p189
      %p191 = scmp.ne.s32.totalorder %s182, %s183
      %p192 = scmp.eq.s32.totalorder %s25, 0
      %p193 = por %p191, %p192
      %p194 = scmp.ne.s32.totalorder %s182, %s183
      %p195 = scmp.eq.s32.totalorder %s26, 1
      %p196 = por %p194, %p195
      %p198 = scmp.ne.s32.totalorder %s183, %s197
      %p199 = scmp.eq.s32.totalorder %s26, 0
      %p200 = por %p198, %p199
      %s202 = sadd.s32 %s201, 1
      %p205 = scmp.eq.s32.totalorder %s20, 1
      %p206 = scmp.ne.s32.totalorder %s201, %s203
      %p207 = scmp.eq.s32.totalorder %s20, 0
      %p208 = por %p206, %p207
      %p209 = scmp.ne.s32.totalorder %s201, %s203
      %p210 = scmp.eq.s32.totalorder %s25, 1
      %p211 = por %p209, %p210
      %p212 = scmp.ne.s32.totalorder %s203, %s204
      %p213 = scmp.eq.s32.totalorder %s25, 0
      %p214 = por %p212, %p213
      %p215 = scmp.ne.s32.totalorder %s203, %s204
      %p216 = scmp.eq.s32.totalorder %s26, 1
      %p217 = por %p215, %p216
      %p219 = scmp.ne.s32.totalorder %s204, %s218
      %p220 = scmp.eq.s32.totalorder %s26, 0
      %p221 = por %p219, %p220
      %s222 = ssub.s32 %s20, %s27
      %p223 = scmp.eq.s32.totalorder %s222, 0
      %s225 = sadd.s32 %s224, 1
      %s226 = scalar_select %p223, %s224, %s225
      %p229 = pneg %p223
      %p230 = scmp.eq.s32.totalorder %s20, 1
      %p231 = por %p229, %p230
      %p232 = scmp.ne.s32.totalorder %s224, %s227
      %p233 = scmp.eq.s32.totalorder %s20, 0
      %p234 = por %p232, %p233
      %p235 = scmp.ne.s32.totalorder %s224, %s227
      %p236 = scmp.eq.s32.totalorder %s25, 1
      %p237 = por %p235, %p236
      %p238 = scmp.ne.s32.totalorder %s227, %s228
      %p239 = scmp.eq.s32.totalorder %s25, 0
      %p240 = por %p238, %p239
      %p241 = scmp.ne.s32.totalorder %s227, %s228
      %p242 = scmp.eq.s32.totalorder %s26, 1
      %p243 = por %p241, %p242
      %p245 = scmp.ne.s32.totalorder %s228, %s244
      %p246 = scmp.eq.s32.totalorder %s26, 0
      %p247 = por %p245, %p246
      %p248 = scmp.le.s32.totalorder 1, %s20
      %p249 = scmp.lt.s32.totalorder %s20, 3
      %p250 = pnand %p248, %p249
      %p251 = pneg %p250
      // Predicated region
      $region9: #{tpu_custom_call.1} parent=5 // pred_check
        _
      $region10: #{tpu_custom_call.1} parent=5 // pred_check_branch
        %253 = sbr.rel (%p250) target = $region12
      $region11: #{tpu_custom_call.1} parent=5 // pred_region
        %s254 = ssub.s32 %s20, 1
        // Predicated region
        $region13: #{tpu_custom_call.1} parent=11 // pred_check
          %p255 = pneg %p67
        $region14: #{tpu_custom_call.1} parent=11 // pred_check_branch
          %257 = sbr.rel (%p255) target = $region16
        $region15: #{tpu_custom_call.1} parent=11 // pred_region
          _
        $region16: #{tpu_custom_call.1} parent=11 // pred_fallthru
          _
        // Predicated region
        $region17: #{tpu_custom_call.1} parent=11 // pred_check
          %p258 = pneg %p88
        $region18: #{tpu_custom_call.1} parent=11 // pred_check_branch
          %260 = sbr.rel (%p258) target = $region20
        $region19: #{tpu_custom_call.1} parent=11 // pred_region
          _
        $region20: #{tpu_custom_call.1} parent=11 // pred_fallthru
          _
        // Predicated region
        $region21: #{tpu_custom_call.1} parent=11 // pred_check
          %p261 = pneg %p109
        $region22: #{tpu_custom_call.1} parent=11 // pred_check_branch
          %263 = sbr.rel (%p261) target = $region24
        $region23: #{tpu_custom_call.1} parent=11 // pred_region
          %s265 = ssub.s32 2048, 2048
          %266 = vsyncadd [#allocation3], %s265
          %s267 = sshll.u32 [#allocation2], 4
          %s268 = int_to_ptr.vmem [resolvable:$true] %s267
          %273 = dma.hbm_to_vmem [thread:$0]  %s3, 2048, %s268, [#allocation3], 128, 128, 8
        $region24: #{tpu_custom_call.1} parent=11 // pred_fallthru
          _
        // Predicated region
        $region25: #{tpu_custom_call.1} parent=11 // pred_check
          %p274 = pneg %p130
        $region26: #{tpu_custom_call.1} parent=11 // pred_check_branch
          %276 = sbr.rel (%p274) target = $region28
        $region27: #{tpu_custom_call.1} parent=11 // pred_region
          _
        $region28: #{tpu_custom_call.1} parent=11 // pred_fallthru
          _
        // Predicated region
        $region29: #{tpu_custom_call.1} parent=11 // pred_check
          %p277 = pneg %p151
        $region30: #{tpu_custom_call.1} parent=11 // pred_check_branch
          %279 = sbr.rel (%p277) target = $region32
        $region31: #{tpu_custom_call.1} parent=11 // pred_region
          %s281 = ssub.s32 2048, 2048
          %282 = vsyncadd [#allocation6], %s281
          %s283 = sshll.u32 [#allocation5], 4
          %s284 = int_to_ptr.vmem [resolvable:$true] %s283
          %289 = dma.hbm_to_vmem [thread:$0]  %s5, 2048, %s284, [#allocation6], 128, 128, 8
        $region32: #{tpu_custom_call.1} parent=11 // pred_fallthru
          _
        // Predicated region
        $region33: #{tpu_custom_call.1} parent=11 // pred_check
          %p290 = pneg %p172
        $region34: #{tpu_custom_call.1} parent=11 // pred_check_branch
          %292 = sbr.rel (%p290) target = $region36
        $region35: #{tpu_custom_call.1} parent=11 // pred_region
          _
        $region36: #{tpu_custom_call.1} parent=11 // pred_fallthru
          _
        // Predicated region
        $region37: #{tpu_custom_call.1} parent=11 // pred_check
          %p293 = pneg %p193
        $region38: #{tpu_custom_call.1} parent=11 // pred_check_branch
          %295 = sbr.rel (%p293) target = $region40
        $region39: #{tpu_custom_call.1} parent=11 // pred_region
          %s297 = ssub.s32 2048, 2048
          %298 = vsyncadd [#allocation6], %s297
          %s299 = sshll.u32 [#allocation7], 4
          %s300 = int_to_ptr.vmem [resolvable:$true] %s299
          %305 = dma.hbm_to_vmem [thread:$0]  %s7, 2048, %s300, [#allocation6], 128, 128, 8
        $region40: #{tpu_custom_call.1} parent=11 // pred_fallthru
          _
        // Predicated region
        $region41: #{tpu_custom_call.1} parent=11 // pred_check
          %p306 = pneg %p214
        $region42: #{tpu_custom_call.1} parent=11 // pred_check_branch
          %308 = sbr.rel (%p306) target = $region44
        $region43: #{tpu_custom_call.1} parent=11 // pred_region
          _
        $region44: #{tpu_custom_call.1} parent=11 // pred_fallthru
          _
      $region12: #{tpu_custom_call.1} parent=5 // pred_fallthru
        _
      %p309 = scmp.lt.s32.totalorder %s20, 2
      // Predicated region
      $region45: #{tpu_custom_call.1} parent=5 // pred_check
        %p310 = pneg %p309
      $region46: #{tpu_custom_call.1} parent=5 // pred_check_branch
        %312 = sbr.rel (%p310) target = $region48
      $region47: #{tpu_custom_call.1} parent=5 // pred_region
        // Predicated region
        $region49: #{tpu_custom_call.1} parent=47 // pred_check
          %p313 = pneg %p40
        $region50: #{tpu_custom_call.1} parent=47 // pred_check_branch
          %315 = sbr.rel (%p313) target = $region52
        $region51: #{tpu_custom_call.1} parent=47 // pred_region
          %p316 = scmp.lt.s32.totalorder %s20, 1
          %s317 = scalar_select %p316, %s20, 1
          %s318 = smul.addr %s317, 8
          %s319 = scalar_lea.vmem %s0, %s318
        $region52: #{tpu_custom_call.1} parent=47 // pred_fallthru
          _
      $region48: #{tpu_custom_call.1} parent=5 // pred_fallthru
        _
      %p320 = scmp.le.s32.totalorder 1, %s20
      %p321 = scmp.lt.s32.totalorder %s20, 3
      %p322 = pnand %p320, %p321
      %p323 = pneg %p322
      // Predicated region
      $region53: #{tpu_custom_call.1} parent=5 // pred_check
        _
      $region54: #{tpu_custom_call.1} parent=5 // pred_check_branch
        %325 = sbr.rel (%p322) target = $region56
      $region55: #{tpu_custom_call.1} parent=5 // pred_region
        %s326 = ssub.s32 %s20, 1
        // Predicated region
        $region57: #{tpu_custom_call.1} parent=55 // pred_check
          %p327 = pneg %p109
        $region58: #{tpu_custom_call.1} parent=55 // pred_check_branch
          %329 = sbr.rel (%p327) target = $region60
        $region59: #{tpu_custom_call.1} parent=55 // pred_region
          %330 = dma.done [#allocation3], 2048
        $region60: #{tpu_custom_call.1} parent=55 // pred_fallthru
          _
        // Predicated region
        $region61: #{tpu_custom_call.1} parent=55 // pred_check
          %p331 = pneg %p151
        $region62: #{tpu_custom_call.1} parent=55 // pred_check_branch
          %333 = sbr.rel (%p331) target = $region64
        $region63: #{tpu_custom_call.1} parent=55 // pred_region
          %334 = dma.done [#allocation6], 2048
        $region64: #{tpu_custom_call.1} parent=55 // pred_fallthru
          _
        // Predicated region
        $region65: #{tpu_custom_call.1} parent=55 // pred_check
          %p335 = pneg %p193
        $region66: #{tpu_custom_call.1} parent=55 // pred_check_branch
          %337 = sbr.rel (%p335) target = $region68
        $region67: #{tpu_custom_call.1} parent=55 // pred_region
          %338 = dma.done [#allocation6], 2048
        $region68: #{tpu_custom_call.1} parent=55 // pred_fallthru
          _
        %p339 = scmp.lt.s32.totalorder %s25, 1
        %s340 = scalar_select %p339, %s25, 1
        %s341 = smul.addr %s340, 8
        %s342 = scalar_lea.vmem %s0, %s341
        %p343 = pneg %p46
        %p344 = pneg %p43
        %p345 = pneg %p67
        %p346 = pneg %p64
        %p347 = pneg %p88
        %p348 = pneg %p85
        %p349 = pneg %p109
        %p350 = pneg %p106
        %p351 = pneg %p130
        %p352 = pneg %p127
        %p353 = pneg %p151
        %p354 = pneg %p148
        %p355 = pneg %p172
        %p356 = pneg %p169
        %p357 = pneg %p193
        %p358 = pneg %p190
        %p359 = pneg %p214
        %p360 = pneg %p211
        %p361 = pneg %p240
        %p362 = pneg %p237
        %s363 = sand.u32 %s227, 1
        %s364 = scalar_lea.sflag [#allocation4], %s363
        %s365 = sand.u32 %s227, 1
        %s366 = smul.addr %s365, 8
        %s367 = scalar_lea.vmem [#allocation8], %s366
        %p368 = scmp.lt.s32.totalorder %s25, 1
        %s369 = scalar_select %p368, %s25, 1
        %s370 = smul.addr %s369, 8
        %s371 = scalar_lea.vmem %s0, %s370
        %v372 = vld [vmem:[%s371] sm:$0xff]
        %v373 = vld [vmem:[%s1] sm:$0xf]
        %v374 = vld [vmem:[%s2] sm:$0x1]
        %v376 = vlaneseq
        %v377 = vshrl.u32 %v376, 7
        %v378 = vsub.s32 0, %v377
        %v379 = vrot.slane %v374, %v378
        %vm381 = vcmask 31744
        %v383 = vsel %vm381, %v372, 0
        %vm385 = vcmask 1043456
        %v387 = vsel %vm385, %v373, 0
        %389 = vmatprep.subr.mxu0 0.0
        %390 = vmatpush1.msra.mxu0 %v387
        %391 = vmatprep.subr.mxu0 0.0
        %392 = vmatpush1.msra.mxu0 0.0
        %393 = vmatprep.subr.mxu0 0.0
        %394 = vmatpush1.msra.mxu0 0.0
        %395 = vmatprep.subr.mxu0 0.0
        %396 = vmatpush1.msra.mxu0 0.0
        %397 = vmatprep.subr.mxu0 0.0
        %398 = vmatpush1.msra.mxu0 0.0
        %399 = vmatprep.subr.mxu0 0.0
        %400 = vmatpush1.msra.mxu0 0.0
        %401 = vmatprep.subr.mxu0 0.0
        %402 = vmatpush1.msra.mxu0 0.0
        %403 = vmatprep.subr.mxu0 0.0
        %404 = vmatpush1.msra.mxu0 0.0
        %405 = vmatprep.subr.mxu0 0.0
        %406 = vmatpush1.msra.mxu0 0.0
        %407 = vmatprep.subr.mxu0 0.0
        %408 = vmatpush1.msra.mxu0 0.0
        %409 = vmatprep.subr.mxu0 0.0
        %410 = vmatpush1.msra.mxu0 0.0
        %411 = vmatprep.subr.mxu0 0.0
        %412 = vmatpush1.msra.mxu0 0.0
        %413 = vmatprep.subr.mxu0 0.0
        %414 = vmatpush1.msra.mxu0 0.0
        %415 = vmatprep.subr.mxu0 0.0
        %416 = vmatpush1.msra.mxu0 0.0
        %417 = vmatprep.subr.mxu0 0.0
        %418 = vmatpush1.msra.mxu0 0.0
        %419 = vmatprep.subr.mxu0 0.0
        %420 = vmatpush1.msra.mxu0 0.0
        %421 = vmatprep.subr.mxu0 0.0
        %422 = vmatpush1.msra.mxu0 0.0
        %423 = vmatprep.subr.mxu0 0.0
        %424 = vmatpush1.msra.mxu0 0.0
        %425 = vmatprep.subr.mxu0 0.0
        %426 = vmatpush1.msra.mxu0 0.0
        %427 = vmatprep.subr.mxu0 0.0
        %428 = vmatpush1.msra.mxu0 0.0
        %429 = vmatprep.subr.mxu0 0.0
        %430 = vmatpush1.msra.mxu0 0.0
        %431 = vmatprep.subr.mxu0 0.0
        %432 = vmatpush1.msra.mxu0 0.0
        %433 = vmatprep.subr.mxu0 0.0
        %434 = vmatpush1.msra.mxu0 0.0
        %435 = vmatprep.subr.mxu0 0.0
        %436 = vmatpush1.msra.mxu0 0.0
        %437 = vmatprep.subr.mxu0 0.0
        %438 = vmatpush1.msra.mxu0 0.0
        %439 = vmatprep.subr.mxu0 0.0
        %440 = vmatpush1.msra.mxu0 0.0
        %441 = vmatprep.subr.mxu0 0.0
        %442 = vmatpush1.msra.mxu0 0.0
        %443 = vmatprep.subr.mxu0 0.0
        %444 = vmatpush1.msra.mxu0 0.0
        %445 = vmatprep.subr.mxu0 0.0
        %446 = vmatpush1.msra.mxu0 0.0
        %447 = vmatprep.subr.mxu0 0.0
        %448 = vmatpush1.msra.mxu0 0.0
        %449 = vmatprep.subr.mxu0 0.0
        %450 = vmatpush1.msra.mxu0 0.0
        %451 = vmatprep.subr.mxu0 0.0
        %452 = vmatpush1.msra.mxu0 0.0
        %453 = vmatprep.mubr.f32.mxu0 0.0
        %454 = vmatmul.mubr.f32.gmra.mrb[0].mxu0 %v383
        %v455 = vpop.f32.mrb[0].mxu0
        %v456 = vadd.f32 %v379, %v455
        %v457 = vpop.f32.mrb[0].mxu0
        %458 = vdwg.mxu0
        %v459 = vmax.f32 %v456, 0.0
        %v460 = vld [vmem:[#allocation2] sm:$0xff]
        %v461 = vld [vmem:[#allocation2 + $0x8] sm:$0xff]
        %v462 = vld [vmem:[#allocation2 + $0x10] sm:$0xff]
        %v463 = vld [vmem:[#allocation2 + $0x18] sm:$0xff]
        %v464 = vld [vmem:[#allocation2 + $0x20] sm:$0xff]
        %v465 = vld [vmem:[#allocation2 + $0x28] sm:$0xff]
        %v466 = vld [vmem:[#allocation2 + $0x30] sm:$0xff]
        %v467 = vld [vmem:[#allocation2 + $0x38] sm:$0xff]
        %v468 = vld [vmem:[#allocation2 + $0x40] sm:$0xff]
        %v469 = vld [vmem:[#allocation2 + $0x48] sm:$0xff]
        %v470 = vld [vmem:[#allocation2 + $0x50] sm:$0xff]
        %v471 = vld [vmem:[#allocation2 + $0x58] sm:$0xff]
        %v472 = vld [vmem:[#allocation2 + $0x60] sm:$0xff]
        %v473 = vld [vmem:[#allocation2 + $0x68] sm:$0xff]
        %v474 = vld [vmem:[#allocation2 + $0x70] sm:$0xff]
        %v475 = vld [vmem:[#allocation2 + $0x78] sm:$0xff]
        %v476 = vld [vmem:[%s4] sm:$0x1]
        %v478 = vlaneseq
        %v479 = vshrl.u32 %v478, 7
        %v480 = vsub.s32 0, %v479
        %v481 = vrot.slane %v476, %v480
        %483 = vmatprep.subr.mxu0 0.0
        %484 = vmatpush1.msra.mxu0 %v460
        %485 = vmatprep.subr.mxu0 0.0
        %486 = vmatpush1.msra.mxu0 %v461
        %487 = vmatprep.subr.mxu0 0.0
        %488 = vmatpush1.msra.mxu0 %v462
        %489 = vmatprep.subr.mxu0 0.0
        %490 = vmatpush1.msra.mxu0 %v463
        %491 = vmatprep.subr.mxu0 0.0
        %492 = vmatpush1.msra.mxu0 %v464
        %493 = vmatprep.subr.mxu0 0.0
        %494 = vmatpush1.msra.mxu0 %v465
        %495 = vmatprep.subr.mxu0 0.0
        %496 = vmatpush1.msra.mxu0 %v466
        %497 = vmatprep.subr.mxu0 0.0
        %498 = vmatpush1.msra.mxu0 %v467
        %499 = vmatprep.subr.mxu0 0.0
        %500 = vmatpush1.msra.mxu0 %v468
        %501 = vmatprep.subr.mxu0 0.0
        %502 = vmatpush1.msra.mxu0 %v469
        %503 = vmatprep.subr.mxu0 0.0
        %504 = vmatpush1.msra.mxu0 %v470
        %505 = vmatprep.subr.mxu0 0.0
        %506 = vmatpush1.msra.mxu0 %v471
        %507 = vmatprep.subr.mxu0 0.0
        %508 = vmatpush1.msra.mxu0 %v472
        %509 = vmatprep.subr.mxu0 0.0
        %510 = vmatpush1.msra.mxu0 %v473
        %511 = vmatprep.subr.mxu0 0.0
        %512 = vmatpush1.msra.mxu0 %v474
        %513 = vmatprep.subr.mxu0 0.0
        %514 = vmatpush1.msra.mxu0 %v475
        %515 = vmatprep.subr.mxu0 0.0
        %516 = vmatpush1.msra.mxu0 0.0
        %517 = vmatprep.subr.mxu0 0.0
        %518 = vmatpush1.msra.mxu0 0.0
        %519 = vmatprep.subr.mxu0 0.0
        %520 = vmatpush1.msra.mxu0 0.0
        %521 = vmatprep.subr.mxu0 0.0
        %522 = vmatpush1.msra.mxu0 0.0
        %523 = vmatprep.subr.mxu0 0.0
        %524 = vmatpush1.msra.mxu0 0.0
        %525 = vmatprep.subr.mxu0 0.0
        %526 = vmatpush1.msra.mxu0 0.0
        %527 = vmatprep.subr.mxu0 0.0
        %528 = vmatpush1.msra.mxu0 0.0
        %529 = vmatprep.subr.mxu0 0.0
        %530 = vmatpush1.msra.mxu0 0.0
        %531 = vmatprep.subr.mxu0 0.0
        %532 = vmatpush1.msra.mxu0 0.0
        %533 = vmatprep.subr.mxu0 0.0
        %534 = vmatpush1.msra.mxu0 0.0
        %535 = vmatprep.subr.mxu0 0.0
        %536 = vmatpush1.msra.mxu0 0.0
        %537 = vmatprep.subr.mxu0 0.0
        %538 = vmatpush1.msra.mxu0 0.0
        %539 = vmatprep.subr.mxu0 0.0
        %540 = vmatpush1.msra.mxu0 0.0
        %541 = vmatprep.subr.mxu0 0.0
        %542 = vmatpush1.msra.mxu0 0.0
        %543 = vmatprep.subr.mxu0 0.0
        %544 = vmatpush1.msra.mxu0 0.0
        %545 = vmatprep.subr.mxu0 0.0
        %546 = vmatpush1.msra.mxu0 0.0
        %547 = vmatprep.mubr.f32.mxu0 0.0
        %548 = vmatmul.mubr.f32.gmra.mrb[0].mxu0 %v459
        %v549 = vpop.f32.mrb[0].mxu0
        %v550 = vadd.f32 %v481, %v549
        %v551 = vpop.f32.mrb[0].mxu0
        %552 = vdwg.mxu0
        %v553 = vmax.f32 %v550, 0.0
        %v554 = vld [vmem:[#allocation5] sm:$0xff]
        %v555 = vld [vmem:[#allocation5 + $0x8] sm:$0xff]
        %v556 = vld [vmem:[#allocation5 + $0x10] sm:$0xff]
        %v557 = vld [vmem:[#allocation5 + $0x18] sm:$0xff]
        %v558 = vld [vmem:[#allocation5 + $0x20] sm:$0xff]
        %v559 = vld [vmem:[#allocation5 + $0x28] sm:$0xff]
        %v560 = vld [vmem:[#allocation5 + $0x30] sm:$0xff]
        %v561 = vld [vmem:[#allocation5 + $0x38] sm:$0xff]
        %v562 = vld [vmem:[#allocation5 + $0x40] sm:$0xff]
        %v563 = vld [vmem:[#allocation5 + $0x48] sm:$0xff]
        %v564 = vld [vmem:[#allocation5 + $0x50] sm:$0xff]
        %v565 = vld [vmem:[#allocation5 + $0x58] sm:$0xff]
        %v566 = vld [vmem:[#allocation5 + $0x60] sm:$0xff]
        %v567 = vld [vmem:[#allocation5 + $0x68] sm:$0xff]
        %v568 = vld [vmem:[#allocation5 + $0x70] sm:$0xff]
        %v569 = vld [vmem:[#allocation5 + $0x78] sm:$0xff]
        %v570 = vld [vmem:[%s6] sm:$0x1]
        %v572 = vlaneseq
        %v573 = vshrl.u32 %v572, 7
        %v574 = vsub.s32 0, %v573
        %v575 = vrot.slane %v570, %v574
        %577 = vmatprep.subr.mxu0 0.0
        %578 = vmatpush1.msra.mxu0 %v554
        %579 = vmatprep.subr.mxu0 0.0
        %580 = vmatpush1.msra.mxu0 %v555
        %581 = vmatprep.subr.mxu0 0.0
        %582 = vmatpush1.msra.mxu0 %v556
        %583 = vmatprep.subr.mxu0 0.0
        %584 = vmatpush1.msra.mxu0 %v557
        %585 = vmatprep.subr.mxu0 0.0
        %586 = vmatpush1.msra.mxu0 %v558
        %587 = vmatprep.subr.mxu0 0.0
        %588 = vmatpush1.msra.mxu0 %v559
        %589 = vmatprep.subr.mxu0 0.0
        %590 = vmatpush1.msra.mxu0 %v560
        %591 = vmatprep.subr.mxu0 0.0
        %592 = vmatpush1.msra.mxu0 %v561
        %593 = vmatprep.subr.mxu0 0.0
        %594 = vmatpush1.msra.mxu0 %v562
        %595 = vmatprep.subr.mxu0 0.0
        %596 = vmatpush1.msra.mxu0 %v563
        %597 = vmatprep.subr.mxu0 0.0
        %598 = vmatpush1.msra.mxu0 %v564
        %599 = vmatprep.subr.mxu0 0.0
        %600 = vmatpush1.msra.mxu0 %v565
        %601 = vmatprep.subr.mxu0 0.0
        %602 = vmatpush1.msra.mxu0 %v566
        %603 = vmatprep.subr.mxu0 0.0
        %604 = vmatpush1.msra.mxu0 %v567
        %605 = vmatprep.subr.mxu0 0.0
        %606 = vmatpush1.msra.mxu0 %v568
        %607 = vmatprep.subr.mxu0 0.0
        %608 = vmatpush1.msra.mxu0 %v569
        %609 = vmatprep.subr.mxu0 0.0
        %610 = vmatpush1.msra.mxu0 0.0
        %611 = vmatprep.subr.mxu0 0.0
        %612 = vmatpush1.msra.mxu0 0.0
        %613 = vmatprep.subr.mxu0 0.0
        %614 = vmatpush1.msra.mxu0 0.0
        %615 = vmatprep.subr.mxu0 0.0
        %616 = vmatpush1.msra.mxu0 0.0
        %617 = vmatprep.subr.mxu0 0.0
        %618 = vmatpush1.msra.mxu0 0.0
        %619 = vmatprep.subr.mxu0 0.0
        %620 = vmatpush1.msra.mxu0 0.0
        %621 = vmatprep.subr.mxu0 0.0
        %622 = vmatpush1.msra.mxu0 0.0
        %623 = vmatprep.subr.mxu0 0.0
        %624 = vmatpush1.msra.mxu0 0.0
        %625 = vmatprep.subr.mxu0 0.0
        %626 = vmatpush1.msra.mxu0 0.0
        %627 = vmatprep.subr.mxu0 0.0
        %628 = vmatpush1.msra.mxu0 0.0
        %629 = vmatprep.subr.mxu0 0.0
        %630 = vmatpush1.msra.mxu0 0.0
        %631 = vmatprep.subr.mxu0 0.0
        %632 = vmatpush1.msra.mxu0 0.0
        %633 = vmatprep.subr.mxu0 0.0
        %634 = vmatpush1.msra.mxu0 0.0
        %635 = vmatprep.subr.mxu0 0.0
        %636 = vmatpush1.msra.mxu0 0.0
        %637 = vmatprep.subr.mxu0 0.0
        %638 = vmatpush1.msra.mxu0 0.0
        %639 = vmatprep.subr.mxu0 0.0
        %640 = vmatpush1.msra.mxu0 0.0
        %641 = vmatprep.mubr.f32.mxu0 0.0
        %642 = vmatmul.mubr.f32.gmra.mrb[0].mxu0 %v553
        %v643 = vpop.f32.mrb[0].mxu0
        %v644 = vadd.f32 %v575, %v643
        %v645 = vpop.f32.mrb[0].mxu0
        %646 = vdwg.mxu0
        %v647 = vmax.f32 %v644, 0.0
        %v648 = vld [vmem:[#allocation7] sm:$0xff]
        %v649 = vld [vmem:[#allocation7 + $0x8] sm:$0xff]
        %v650 = vld [vmem:[#allocation7 + $0x10] sm:$0xff]
        %v651 = vld [vmem:[#allocation7 + $0x18] sm:$0xff]
        %v652 = vld [vmem:[#allocation7 + $0x20] sm:$0xff]
        %v653 = vld [vmem:[#allocation7 + $0x28] sm:$0xff]
        %v654 = vld [vmem:[#allocation7 + $0x30] sm:$0xff]
        %v655 = vld [vmem:[#allocation7 + $0x38] sm:$0xff]
        %v656 = vld [vmem:[#allocation7 + $0x40] sm:$0xff]
        %v657 = vld [vmem:[#allocation7 + $0x48] sm:$0xff]
        %v658 = vld [vmem:[#allocation7 + $0x50] sm:$0xff]
        %v659 = vld [vmem:[#allocation7 + $0x58] sm:$0xff]
        %v660 = vld [vmem:[#allocation7 + $0x60] sm:$0xff]
        %v661 = vld [vmem:[#allocation7 + $0x68] sm:$0xff]
        %v662 = vld [vmem:[#allocation7 + $0x70] sm:$0xff]
        %v663 = vld [vmem:[#allocation7 + $0x78] sm:$0xff]
        %v664 = vld [vmem:[%s8] sm:$0x1]
        %v666 = vlaneseq
        %v667 = vshrl.u32 %v666, 7
        %v668 = vsub.s32 0, %v667
        %v669 = vrot.slane %v664, %v668
        %671 = vmatprep.subr.mxu0 0.0
        %672 = vmatpush1.msra.mxu0 %v648
        %673 = vmatprep.subr.mxu0 0.0
        %674 = vmatpush1.msra.mxu0 %v649
        %675 = vmatprep.subr.mxu0 0.0
        %676 = vmatpush1.msra.mxu0 %v650
        %677 = vmatprep.subr.mxu0 0.0
        %678 = vmatpush1.msra.mxu0 %v651
        %679 = vmatprep.subr.mxu0 0.0
        %680 = vmatpush1.msra.mxu0 %v652
        %681 = vmatprep.subr.mxu0 0.0
        %682 = vmatpush1.msra.mxu0 %v653
        %683 = vmatprep.subr.mxu0 0.0
        %684 = vmatpush1.msra.mxu0 %v654
        %685 = vmatprep.subr.mxu0 0.0
        %686 = vmatpush1.msra.mxu0 %v655
        %687 = vmatprep.subr.mxu0 0.0
        %688 = vmatpush1.msra.mxu0 %v656
        %689 = vmatprep.subr.mxu0 0.0
        %690 = vmatpush1.msra.mxu0 %v657
        %691 = vmatprep.subr.mxu0 0.0
        %692 = vmatpush1.msra.mxu0 %v658
        %693 = vmatprep.subr.mxu0 0.0
        %694 = vmatpush1.msra.mxu0 %v659
        %695 = vmatprep.subr.mxu0 0.0
        %696 = vmatpush1.msra.mxu0 %v660
        %697 = vmatprep.subr.mxu0 0.0
        %698 = vmatpush1.msra.mxu0 %v661
        %699 = vmatprep.subr.mxu0 0.0
        %700 = vmatpush1.msra.mxu0 %v662
        %701 = vmatprep.subr.mxu0 0.0
        %702 = vmatpush1.msra.mxu0 %v663
        %703 = vmatprep.subr.mxu0 0.0
        %704 = vmatpush1.msra.mxu0 0.0
        %705 = vmatprep.subr.mxu0 0.0
        %706 = vmatpush1.msra.mxu0 0.0
        %707 = vmatprep.subr.mxu0 0.0
        %708 = vmatpush1.msra.mxu0 0.0
        %709 = vmatprep.subr.mxu0 0.0
        %710 = vmatpush1.msra.mxu0 0.0
        %711 = vmatprep.subr.mxu0 0.0
        %712 = vmatpush1.msra.mxu0 0.0
        %713 = vmatprep.subr.mxu0 0.0
        %714 = vmatpush1.msra.mxu0 0.0
        %715 = vmatprep.subr.mxu0 0.0
        %716 = vmatpush1.msra.mxu0 0.0
        %717 = vmatprep.subr.mxu0 0.0
        %718 = vmatpush1.msra.mxu0 0.0
        %719 = vmatprep.subr.mxu0 0.0
        %720 = vmatpush1.msra.mxu0 0.0
        %721 = vmatprep.subr.mxu0 0.0
        %722 = vmatpush1.msra.mxu0 0.0
        %723 = vmatprep.subr.mxu0 0.0
        %724 = vmatpush1.msra.mxu0 0.0
        %725 = vmatprep.subr.mxu0 0.0
        %726 = vmatpush1.msra.mxu0 0.0
        %727 = vmatprep.subr.mxu0 0.0
        %728 = vmatpush1.msra.mxu0 0.0
        %729 = vmatprep.subr.mxu0 0.0
        %730 = vmatpush1.msra.mxu0 0.0
        %731 = vmatprep.subr.mxu0 0.0
        %732 = vmatpush1.msra.mxu0 0.0
        %733 = vmatprep.subr.mxu0 0.0
        %734 = vmatpush1.msra.mxu0 0.0
        %735 = vmatprep.mubr.f32.mxu0 0.0
        %736 = vmatmul.mubr.f32.gmra.mrb[0].mxu0 %v647
        %v737 = vpop.f32.mrb[0].mxu0
        %v738 = vadd.f32 %v669, %v737
        %v739 = vpop.f32.mrb[0].mxu0
        %740 = vdwg.mxu0
        %741 = vst [vmem:[%s367] sm:$0xff] %v738
        %s742 = sand.u32 %s227, 1
        %s743 = scalar_lea.sflag [#allocation4], %s742
        %s744 = sand.u32 %s227, 1
        %s745 = smul.addr %s744, 8
        %s746 = scalar_lea.vmem [#allocation8], %s745
        // Predicated region
        $region69: #{tpu_custom_call.1} parent=55 // pred_check
          %p747 = pneg %p237
        $region70: #{tpu_custom_call.1} parent=55 // pred_check_branch
          %749 = sbr.rel (%p747) target = $region72
        $region71: #{tpu_custom_call.1} parent=55 // pred_region
          %s751 = ssub.s32 128, 128
          %752 = vsyncadd %s743, %s751
          %s753 = smul.addr %s25, 128
          %s754 = scalar_lea.hbm %s9, %s753
          %s756 = sshll.u32 %s746, 4
          %s757 = int_to_ptr.vmem [resolvable:$true] %s756
          %759 = dma.vmem_to_hbm [thread:$0]  %s757, 128, %s754, %s743
        $region72: #{tpu_custom_call.1} parent=55 // pred_fallthru
          _
      $region56: #{tpu_custom_call.1} parent=5 // pred_fallthru
        _
      %p760 = scmp.le.s32.totalorder 2, %s20
      // Predicated region
      $region73: #{tpu_custom_call.1} parent=5 // pred_check
        %p761 = pneg %p760
      $region74: #{tpu_custom_call.1} parent=5 // pred_check_branch
        %763 = sbr.rel (%p761) target = $region76
      $region75: #{tpu_custom_call.1} parent=5 // pred_region
        %s764 = ssub.s32 %s20, 2
        // Predicated region
        $region77: #{tpu_custom_call.1} parent=75 // pred_check
          %p765 = pneg %p243
        $region78: #{tpu_custom_call.1} parent=75 // pred_check_branch
          %767 = sbr.rel (%p765) target = $region80
        $region79: #{tpu_custom_call.1} parent=75 // pred_region
          %s768 = sand.u32 %s228, 1
          %s769 = scalar_lea.sflag [#allocation4], %s768
          %s770 = sand.u32 %s228, 1
          %s771 = smul.addr %s770, 8
          %s772 = scalar_lea.vmem [#allocation8], %s771
          %773 = dma.done %s769, 128
        $region80: #{tpu_custom_call.1} parent=75 // pred_fallthru
          _
      $region76: #{tpu_custom_call.1} parent=5 // pred_fallthru
        _
    $region6: #{tpu_custom_call.1} parent=1 // loop_footer
      %s24 = sadd.s32 1, %s20
    $region7: #{tpu_custom_call.1} parent=1 // loop_footer_branch
      %19 = sbr.rel target = $region3
    $region8: #{tpu_custom_call.1} parent=1 // loop_exit
      _
    %774 = vsyncpa [#allocation3], 1
    %s775 = scalar_lea.sflag [#allocation3], 1
    %776 = vsyncpa %s775, 1
    %777 = vsyncpa [#allocation6], 1
    %778 = vsyncpa [#allocation4], 1
    %s779 = scalar_lea.sflag [#allocation4], 1
    %780 = vsyncpa %s779, 1

// kernel: tpu_custom_call.1
$region0: #{tpu_custom_call.1}
  #allocation0 [shape = 'u32[]', space=smem, size = 0x4, offset = 0x4, fixed_abs, tag = 'smem constant byte address 0x4 - core index']
  #allocation1 [shape = 'u32[144,128]{1,0:T(1,128)}', space=vmem, size = 0x12000, scoped, tag = 'internal scratch']
  %s0 = inlined_call_operand.vmem [shape: f32[16,4], index: 0, kind: input, shape index: {}]
  %s1 = inlined_call_operand.vmem [shape: f32[4,128], index: 1, kind: input, shape index: {}]
  %s2 = inlined_call_operand.vmem [shape: f32[1,128], index: 2, kind: input, shape index: {}]
  %s3 = inlined_call_operand.hbm [shape: f32[128,128], index: 3, kind: input, shape index: {}]
  %s4 = inlined_call_operand.vmem [shape: f32[1,128], index: 4, kind: input, shape index: {}]
  %s5 = inlined_call_operand.hbm [shape: f32[128,128], index: 5, kind: input, shape index: {}]
  %s6 = inlined_call_operand.vmem [shape: f32[1,128], index: 6, kind: input, shape index: {}]
  %s7 = inlined_call_operand.hbm [shape: f32[128,128], index: 7, kind: input, shape index: {}]
  %s8 = inlined_call_operand.vmem [shape: f32[1,128], index: 8, kind: input, shape index: {}]
  %s9 = inlined_call_operand.hbm [shape: f32[16,128], index: 9, kind: output, shape index: {}]
  %s10 = sld [smem:[#allocation0]]
  $region81: #{tpu_custom_call.1} parent=0
    _
  %s12 = ssub.s32 1, %s10
  %s13 = scalar_select 0, %s12, %s10
  $region1: #{tpu_custom_call.1} parent=0
    #allocation2 [shape = 'u8[65536]{0}', space=vmem, size = 0x10000, scoped, tag = 'input window, operand 3, single buffered']
    #allocation3 [shape = 's32[2]{0}', space=sflag, size = 0x8, scoped, tag = 'scoped memory for tpu_custom_call.1']
    #allocation4 [shape = 's32[2]{0}', space=sflag, size = 0x8, scoped, tag = 'scoped memory for tpu_custom_call.1']
    #allocation5 [shape = 'u8[65536]{0}', space=vmem, size = 0x10000, scoped, tag = 'input window, operand 5, single buffered']
    #allocation6 [shape = 's32[1]{0}', space=sflag, size = 0x4, scoped, tag = 'scoped memory for tpu_custom_call.1']
    #allocation7 [shape = 'u8[65536]{0}', space=vmem, size = 0x10000, scoped, tag = 'input window, operand 7, single buffered']
    #allocation8 [shape = 'u8[8192]{0}', space=vmem, size = 0x2000, scoped, tag = 'output window, operand 0']
    %14 = vsyncpa [#allocation3], 0
    %15 = vsyncpa [#allocation6], 0
    %16 = vsyncpa [#allocation4], 0
    %s17 = scalar_lea.sflag [#allocation4], 1
    %18 = vsyncpa %s17, 0
    loop: start=0, step=1, limit=4
    $region2: #{tpu_custom_call.1} parent=1 // loop_pre_header
      _
    $region3: #{tpu_custom_call.1} parent=1 // loop_header
      %s20 = sphi 0, %s24
      %p21 = scmp.ge.s32.totalorder %s20, 4
      %s30 = sphi 0, %s32
      %s33 = sphi 0, %s30
      %s34 = sphi 0, %s33
      %s50 = sphi 0, %s34
      %s54 = sphi 0, %s54
      %s56 = sphi 0, %s54
      %s57 = sphi 0, %s56
      %s71 = sphi 0, %s57
      %s75 = sphi 0, %s75
      %s77 = sphi 0, %s75
      %s78 = sphi 0, %s77
      %s92 = sphi 0, %s78
      %s96 = sphi 0, %s96
      %s98 = sphi 0, %s96
      %s99 = sphi 0, %s98
      %s113 = sphi 0, %s99
      %s117 = sphi 0, %s117
      %s119 = sphi 0, %s117
      %s120 = sphi 0, %s119
      %s134 = sphi 0, %s120
      %s138 = sphi 0, %s138
      %s140 = sphi 0, %s138
      %s141 = sphi 0, %s140
      %s155 = sphi 0, %s141
      %s159 = sphi 0, %s159
      %s161 = sphi 0, %s159
      %s162 = sphi 0, %s161
      %s176 = sphi 0, %s162
      %s180 = sphi 0, %s180
      %s182 = sphi 0, %s180
      %s183 = sphi 0, %s182
      %s197 = sphi 0, %s183
      %s201 = sphi 0, %s201
      %s203 = sphi 0, %s201
      %s204 = sphi 0, %s203
      %s218 = sphi 0, %s204
      %s224 = sphi 0, %s226
      %s227 = sphi 0, %s224
      %s228 = sphi 0, %s227
      %s244 = sphi 0, %s228
    $region4: #{tpu_custom_call.1} parent=1 // loop_header_branch
      %23 = sbr.rel (%p21) target = $region8
    $region5: #{tpu_custom_call.1} parent=1 // loop_body
      %s25 = ssub.s32 %s20, 1
      %s26 = ssub.s32 %s20, 2
      %s27 = sadd.s32 %s20, 1
      %s28 = ssub.s32 %s20, %s27
      %p29 = scmp.eq.s32.totalorder %s28, 0
      %s31 = sadd.s32 %s30, 1
      %s32 = scalar_select %p29, %s30, %s31
      %p35 = pneg %p29
      %p36 = scmp.eq.s32.totalorder %s20, 1
      %p37 = por %p35, %p36
      %p38 = scmp.ne.s32.totalorder %s30, %s33
      %p39 = scmp.eq.s32.totalorder %s20, 0
      %p40 = por %p38, %p39
      %p41 = scmp.ne.s32.totalorder %s30, %s33
      %p42 = scmp.eq.s32.totalorder %s25, 1
      %p43 = por %p41, %p42
      %p44 = scmp.ne.s32.totalorder %s33, %s34
      %p45 = scmp.eq.s32.totalorder %s25, 0
      %p46 = por %p44, %p45
      %p47 = scmp.ne.s32.totalorder %s33, %s34
      %p48 = scmp.eq.s32.totalorder %s26, 1
      %p49 = por %p47, %p48
      %p51 = scmp.ne.s32.totalorder %s34, %s50
      %p52 = scmp.eq.s32.totalorder %s26, 0
      %p53 = por %p51, %p52
      %s55 = sadd.s32 %s54, 1
      %p58 = scmp.eq.s32.totalorder %s20, 1
      %p59 = scmp.ne.s32.totalorder %s54, %s56
      %p60 = scmp.eq.s32.totalorder %s20, 0
      %p61 = por %p59, %p60
      %p62 = scmp.ne.s32.totalorder %s54, %s56
      %p63 = scmp.eq.s32.totalorder %s25, 1
      %p64 = por %p62, %p63
      %p65 = scmp.ne.s32.totalorder %s56, %s57
      %p66 = scmp.eq.s32.totalorder %s25, 0
      %p67 = por %p65, %p66
      %p68 = scmp.ne.s32.totalorder %s56, %s57
      %p69 = scmp.eq.s32.totalorder %s26, 1
      %p70 = por %p68, %p69
      %p72 = scmp.ne.s32.totalorder %s57, %s71
      %p73 = scmp.eq.s32.totalorder %s26, 0
      %p74 = por %p72, %p73
      %s76 = sadd.s32 %s75, 1
      %p79 = scmp.eq.s32.totalorder %s20, 1
      %p80 = scmp.ne.s32.totalorder %s75, %s77
      %p81 = scmp.eq.s32.totalorder %s20, 0
      %p82 = por %p80, %p81
      %p83 = scmp.ne.s32.totalorder %s75, %s77
      %p84 = scmp.eq.s32.totalorder %s25, 1
      %p85 = por %p83, %p84
      %p86 = scmp.ne.s32.totalorder %s77, %s78
      %p87 = scmp.eq.s32.totalorder %s25, 0
      %p88 = por %p86, %p87
      %p89 = scmp.ne.s32.totalorder %s77, %s78
      %p90 = scmp.eq.s32.totalorder %s26, 1
      %p91 = por %p89, %p90
      %p93 = scmp.ne.s32.totalorder %s78, %s92
      %p94 = scmp.eq.s32.totalorder %s26, 0
      %p95 = por %p93, %p94
      %s97 = sadd.s32 %s96, 1
      %p100 = scmp.eq.s32.totalorder %s20, 1
      %p101 = scmp.ne.s32.totalorder %s96, %s98
      %p102 = scmp.eq.s32.totalorder %s20, 0
      %p103 = por %p101, %p102
      %p104 = scmp.ne.s32.totalorder %s96, %s98
      %p105 = scmp.eq.s32.totalorder %s25, 1
      %p106 = por %p104, %p105
      %p107 = scmp.ne.s32.totalorder %s98, %s99
      %p108 = scmp.eq.s32.totalorder %s25, 0
      %p109 = por %p107, %p108
      %p110 = scmp.ne.s32.totalorder %s98, %s99
      %p111 = scmp.eq.s32.totalorder %s26, 1
      %p112 = por %p110, %p111
      %p114 = scmp.ne.s32.totalorder %s99, %s113
      %p115 = scmp.eq.s32.totalorder %s26, 0
      %p116 = por %p114, %p115
      %s118 = sadd.s32 %s117, 1
      %p121 = scmp.eq.s32.totalorder %s20, 1
      %p122 = scmp.ne.s32.totalorder %s117, %s119
      %p123 = scmp.eq.s32.totalorder %s20, 0
      %p124 = por %p122, %p123
      %p125 = scmp.ne.s32.totalorder %s117, %s119
      %p126 = scmp.eq.s32.totalorder %s25, 1
      %p127 = por %p125, %p126
      %p128 = scmp.ne.s32.totalorder %s119, %s120
      %p129 = scmp.eq.s32.totalorder %s25, 0
      %p130 = por %p128, %p129
      %p131 = scmp.ne.s32.totalorder %s119, %s120
      %p132 = scmp.eq.s32.totalorder %s26, 1
      %p133 = por %p131, %p132
      %p135 = scmp.ne.s32.totalorder %s120, %s134
      %p136 = scmp.eq.s32.totalorder %s26, 0
      %p137 = por %p135, %p136
      %s139 = sadd.s32 %s138, 1
      %p142 = scmp.eq.s32.totalorder %s20, 1
      %p143 = scmp.ne.s32.totalorder %s138, %s140
      %p144 = scmp.eq.s32.totalorder %s20, 0
      %p145 = por %p143, %p144
      %p146 = scmp.ne.s32.totalorder %s138, %s140
      %p147 = scmp.eq.s32.totalorder %s25, 1
      %p148 = por %p146, %p147
      %p149 = scmp.ne.s32.totalorder %s140, %s141
      %p150 = scmp.eq.s32.totalorder %s25, 0
      %p151 = por %p149, %p150
      %p152 = scmp.ne.s32.totalorder %s140, %s141
      %p153 = scmp.eq.s32.totalorder %s26, 1
      %p154 = por %p152, %p153
      %p156 = scmp.ne.s32.totalorder %s141, %s155
      %p157 = scmp.eq.s32.totalorder %s26, 0
      %p158 = por %p156, %p157
      %s160 = sadd.s32 %s159, 1
      %p163 = scmp.eq.s32.totalorder %s20, 1
      %p164 = scmp.ne.s32.totalorder %s159, %s161
      %p165 = scmp.eq.s32.totalorder %s20, 0
      %p166 = por %p164, %p165
      %p167 = scmp.ne.s32.totalorder %s159, %s161
      %p168 = scmp.eq.s32.totalorder %s25, 1
      %p169 = por %p167, %p168
      %p170 = scmp.ne.s32.totalorder %s161, %s162
      %p171 = scmp.eq.s32.totalorder %s25, 0
      %p172 = por %p170, %p171
      %p173 = scmp.ne.s32.totalorder %s161, %s162
      %p174 = scmp.eq.s32.totalorder %s26, 1
      %p175 = por %p173, %p174
      %p177 = scmp.ne.s32.totalorder %s162, %s176
      %p178 = scmp.eq.s32.totalorder %s26, 0
      %p179 = por %p177, %p178
      %s181 = sadd.s32 %s180, 1
      %p184 = scmp.eq.s32.totalorder %s20, 1
      %p185 = scmp.ne.s32.totalorder %s180, %s182
      %p186 = scmp.eq.s32.totalorder %s20, 0
      %p187 = por %p185, %p186
      %p188 = scmp.ne.s32.totalorder %s180, %s182
      %p189 = scmp.eq.s32.totalorder %s25, 1
      %p190 = por %p188, %p189
      %p191 = scmp.ne.s32.totalorder %s182, %s183
      %p192 = scmp.eq.s32.totalorder %s25, 0
      %p193 = por %p191, %p192
      %p194 = scmp.ne.s32.totalorder %s182, %s183
      %p195 = scmp.eq.s32.totalorder %s26, 1
      %p196 = por %p194, %p195
      %p198 = scmp.ne.s32.totalorder %s183, %s197
      %p199 = scmp.eq.s32.totalorder %s26, 0
      %p200 = por %p198, %p199
      %s202 = sadd.s32 %s201, 1
      %p205 = scmp.eq.s32.totalorder %s20, 1
      %p206 = scmp.ne.s32.totalorder %s201, %s203
      %p207 = scmp.eq.s32.totalorder %s20, 0
      %p208 = por %p206, %p207
      %p209 = scmp.ne.s32.totalorder %s201, %s203
      %p210 = scmp.eq.s32.totalorder %s25, 1
      %p211 = por %p209, %p210
      %p212 = scmp.ne.s32.totalorder %s203, %s204
      %p213 = scmp.eq.s32.totalorder %s25, 0
      %p214 = por %p212, %p213
      %p215 = scmp.ne.s32.totalorder %s203, %s204
      %p216 = scmp.eq.s32.totalorder %s26, 1
      %p217 = por %p215, %p216
      %p219 = scmp.ne.s32.totalorder %s204, %s218
      %p220 = scmp.eq.s32.totalorder %s26, 0
      %p221 = por %p219, %p220
      %s222 = ssub.s32 %s20, %s27
      %p223 = scmp.eq.s32.totalorder %s222, 0
      %s225 = sadd.s32 %s224, 1
      %s226 = scalar_select %p223, %s224, %s225
      %p229 = pneg %p223
      %p230 = scmp.eq.s32.totalorder %s20, 1
      %p231 = por %p229, %p230
      %p232 = scmp.ne.s32.totalorder %s224, %s227
      %p233 = scmp.eq.s32.totalorder %s20, 0
      %p234 = por %p232, %p233
      %p235 = scmp.ne.s32.totalorder %s224, %s227
      %p236 = scmp.eq.s32.totalorder %s25, 1
      %p237 = por %p235, %p236
      %p238 = scmp.ne.s32.totalorder %s227, %s228
      %p239 = scmp.eq.s32.totalorder %s25, 0
      %p240 = por %p238, %p239
      %p241 = scmp.ne.s32.totalorder %s227, %s228
      %p242 = scmp.eq.s32.totalorder %s26, 1
      %p243 = por %p241, %p242
      %p245 = scmp.ne.s32.totalorder %s228, %s244
      %p246 = scmp.eq.s32.totalorder %s26, 0
      %p247 = por %p245, %p246
      %p248 = scmp.le.s32.totalorder 1, %s20
      %p249 = scmp.lt.s32.totalorder %s20, 3
      %p250 = pnand %p248, %p249
      %p251 = pneg %p250
      // Predicated region
      $region9: #{tpu_custom_call.1} parent=5 // pred_check
        _
      $region10: #{tpu_custom_call.1} parent=5 // pred_check_branch
        %253 = sbr.rel (%p250) target = $region12
      $region11: #{tpu_custom_call.1} parent=5 // pred_region
        %s254 = ssub.s32 %s20, 1
        // Predicated region
        $region13: #{tpu_custom_call.1} parent=11 // pred_check
          %p255 = pneg %p67
        $region14: #{tpu_custom_call.1} parent=11 // pred_check_branch
          %257 = sbr.rel (%p255) target = $region16
        $region15: #{tpu_custom_call.1} parent=11 // pred_region
          _
        $region16: #{tpu_custom_call.1} parent=11 // pred_fallthru
          _
        // Predicated region
        $region17: #{tpu_custom_call.1} parent=11 // pred_check
          %p258 = pneg %p88
        $region18: #{tpu_custom_call.1} parent=11 // pred_check_branch
          %260 = sbr.rel (%p258) target = $region20
        $region19: #{tpu_custom_call.1} parent=11 // pred_region
          _
        $region20: #{tpu_custom_call.1} parent=11 // pred_fallthru
          _
        // Predicated region
        $region21: #{tpu_custom_call.1} parent=11 // pred_check
          %p261 = pneg %p109
        $region22: #{tpu_custom_call.1} parent=11 // pred_check_branch
          %263 = sbr.rel (%p261) target = $region24
        $region23: #{tpu_custom_call.1} parent=11 // pred_region
          %s265 = ssub.s32 2048, 2048
          %266 = vsyncadd [#allocation3], %s265
          %s267 = sshll.u32 [#allocation2], 4
          %s268 = int_to_ptr.vmem [resolvable:$true] %s267
          %273 = dma.hbm_to_vmem [thread:$0]  %s3, 2048, %s268, [#allocation3], 128, 128, 8
        $region24: #{tpu_custom_call.1} parent=11 // pred_fallthru
          _
        // Predicated region
        $region25: #{tpu_custom_call.1} parent=11 // pred_check
          %p274 = pneg %p130
        $region26: #{tpu_custom_call.1} parent=11 // pred_check_branch
          %276 = sbr.rel (%p274) target = $region28
        $region27: #{tpu_custom_call.1} parent=11 // pred_region
          _
        $region28: #{tpu_custom_call.1} parent=11 // pred_fallthru
          _
        // Predicated region
        $region29: #{tpu_custom_call.1} parent=11 // pred_check
          %p277 = pneg %p151
        $region30: #{tpu_custom_call.1} parent=11 // pred_check_branch
          %279 = sbr.rel (%p277) target = $region32
        $region31: #{tpu_custom_call.1} parent=11 // pred_region
          %s281 = ssub.s32 2048, 2048
          %282 = vsyncadd [#allocation6], %s281
          %s283 = sshll.u32 [#allocation5], 4
          %s284 = int_to_ptr.vmem [resolvable:$true] %s283
          %289 = dma.hbm_to_vmem [thread:$0]  %s5, 2048, %s284, [#allocation6], 128, 128, 8
        $region32: #{tpu_custom_call.1} parent=11 // pred_fallthru
          _
        // Predicated region
        $region33: #{tpu_custom_call.1} parent=11 // pred_check
          %p290 = pneg %p172
        $region34: #{tpu_custom_call.1} parent=11 // pred_check_branch
          %292 = sbr.rel (%p290) target = $region36
        $region35: #{tpu_custom_call.1} parent=11 // pred_region
          _
        $region36: #{tpu_custom_call.1} parent=11 // pred_fallthru
          _
        // Predicated region
        $region37: #{tpu_custom_call.1} parent=11 // pred_check
          %p293 = pneg %p193
        $region38: #{tpu_custom_call.1} parent=11 // pred_check_branch
          %295 = sbr.rel (%p293) target = $region40
        $region39: #{tpu_custom_call.1} parent=11 // pred_region
          %s297 = ssub.s32 2048, 2048
          %298 = vsyncadd [#allocation6], %s297
          %s299 = sshll.u32 [#allocation7], 4
          %s300 = int_to_ptr.vmem [resolvable:$true] %s299
          %305 = dma.hbm_to_vmem [thread:$0]  %s7, 2048, %s300, [#allocation6], 128, 128, 8
        $region40: #{tpu_custom_call.1} parent=11 // pred_fallthru
          _
        // Predicated region
        $region41: #{tpu_custom_call.1} parent=11 // pred_check
          %p306 = pneg %p214
        $region42: #{tpu_custom_call.1} parent=11 // pred_check_branch
          %308 = sbr.rel (%p306) target = $region44
        $region43: #{tpu_custom_call.1} parent=11 // pred_region
          _
        $region44: #{tpu_custom_call.1} parent=11 // pred_fallthru
          _
      $region12: #{tpu_custom_call.1} parent=5 // pred_fallthru
        _
      %p309 = scmp.lt.s32.totalorder %s20, 2
      // Predicated region
      $region45: #{tpu_custom_call.1} parent=5 // pred_check
        %p310 = pneg %p309
      $region46: #{tpu_custom_call.1} parent=5 // pred_check_branch
        %312 = sbr.rel (%p310) target = $region48
      $region47: #{tpu_custom_call.1} parent=5 // pred_region
        // Predicated region
        $region49: #{tpu_custom_call.1} parent=47 // pred_check
          %p313 = pneg %p40
        $region50: #{tpu_custom_call.1} parent=47 // pred_check_branch
          %315 = sbr.rel (%p313) target = $region52
        $region51: #{tpu_custom_call.1} parent=47 // pred_region
          %p316 = scmp.lt.s32.totalorder %s20, 1
          %s317 = scalar_select %p316, %s20, 1
          %s318 = smul.addr %s317, 8
          %s319 = scalar_lea.vmem %s0, %s318
        $region52: #{tpu_custom_call.1} parent=47 // pred_fallthru
          _
      $region48: #{tpu_custom_call.1} parent=5 // pred_fallthru
        _
      %p320 = scmp.le.s32.totalorder 1, %s20
      %p321 = scmp.lt.s32.totalorder %s20, 3
      %p322 = pnand %p320, %p321
      %p323 = pneg %p322
      // Predicated region
      $region53: #{tpu_custom_call.1} parent=5 // pred_check
        _
      $region54: #{tpu_custom_call.1} parent=5 // pred_check_branch
        %325 = sbr.rel (%p322) target = $region56
      $region55: #{tpu_custom_call.1} parent=5 // pred_region
        %s326 = ssub.s32 %s20, 1
        // Predicated region
        $region57: #{tpu_custom_call.1} parent=55 // pred_check
          %p327 = pneg %p109
        $region58: #{tpu_custom_call.1} parent=55 // pred_check_branch
          %329 = sbr.rel (%p327) target = $region60
        $region59: #{tpu_custom_call.1} parent=55 // pred_region
          %330 = dma.done [#allocation3], 2048
        $region60: #{tpu_custom_call.1} parent=55 // pred_fallthru
          _
        // Predicated region
        $region61: #{tpu_custom_call.1} parent=55 // pred_check
          %p331 = pneg %p151
        $region62: #{tpu_custom_call.1} parent=55 // pred_check_branch
          %333 = sbr.rel (%p331) target = $region64
        $region63: #{tpu_custom_call.1} parent=55 // pred_region
          %334 = dma.done [#allocation6], 2048
        $region64: #{tpu_custom_call.1} parent=55 // pred_fallthru
          _
        // Predicated region
        $region65: #{tpu_custom_call.1} parent=55 // pred_check
          %p335 = pneg %p193
        $region66: #{tpu_custom_call.1} parent=55 // pred_check_branch
          %337 = sbr.rel (%p335) target = $region68
        $region67: #{tpu_custom_call.1} parent=55 // pred_region
          %338 = dma.done [#allocation6], 2048
        $region68: #{tpu_custom_call.1} parent=55 // pred_fallthru
          _
        %p339 = scmp.lt.s32.totalorder %s25, 1
        %s340 = scalar_select %p339, %s25, 1
        %s341 = smul.addr %s340, 8
        %s342 = scalar_lea.vmem %s0, %s341
        %p343 = pneg %p46
        %p344 = pneg %p43
        %p345 = pneg %p67
        %p346 = pneg %p64
        %p347 = pneg %p88
        %p348 = pneg %p85
        %p349 = pneg %p109
        %p350 = pneg %p106
        %p351 = pneg %p130
        %p352 = pneg %p127
        %p353 = pneg %p151
        %p354 = pneg %p148
        %p355 = pneg %p172
        %p356 = pneg %p169
        %p357 = pneg %p193
        %p358 = pneg %p190
        %p359 = pneg %p214
        %p360 = pneg %p211
        %p361 = pneg %p240
        %p362 = pneg %p237
        %s363 = sand.u32 %s227, 1
        %s364 = scalar_lea.sflag [#allocation4], %s363
        %s365 = sand.u32 %s227, 1
        %s366 = smul.addr %s365, 8
        %s367 = scalar_lea.vmem [#allocation8], %s366
        %p368 = scmp.lt.s32.totalorder %s25, 1
        %s369 = scalar_select %p368, %s25, 1
        %s370 = smul.addr %s369, 8
        %s371 = scalar_lea.vmem %s0, %s370
        %v372 = vld [vmem:[%s371] sm:$0xff]
        %v373 = vld [vmem:[%s1] sm:$0xf]
        %v374 = vld [vmem:[%s2] sm:$0x1]
        %v376 = vlaneseq
        %v377 = vshrl.u32 %v376, 7
        %v378 = vsub.s32 0, %v377
        %v379 = vrot.slane %v374, %v378
        %vm381 = vcmask 31744
        %v383 = vsel %vm381, %v372, 0
        %vm385 = vcmask 1043456
        %v387 = vsel %vm385, %v373, 0
        %389 = vmatprep.subr.mxu0 0.0
        %390 = vmatpush1.msra.mxu0 %v387
        %391 = vmatprep.subr.mxu0 0.0
        %392 = vmatpush1.msra.mxu0 0.0
        %393 = vmatprep.subr.mxu0 0.0
        %394 = vmatpush1.msra.mxu0 0.0
        %395 = vmatprep.subr.mxu0 0.0
        %396 = vmatpush1.msra.mxu0 0.0
        %397 = vmatprep.subr.mxu0 0.0
        %398 = vmatpush1.msra.mxu0 0.0
        %399 = vmatprep.subr.mxu0 0.0
        %400 = vmatpush1.msra.mxu0 0.0
        %401 = vmatprep.subr.mxu0 0.0
        %402 = vmatpush1.msra.mxu0 0.0
        %403 = vmatprep.subr.mxu0 0.0
        %404 = vmatpush1.msra.mxu0 0.0
        %405 = vmatprep.subr.mxu0 0.0
        %406 = vmatpush1.msra.mxu0 0.0
        %407 = vmatprep.subr.mxu0 0.0
        %408 = vmatpush1.msra.mxu0 0.0
        %409 = vmatprep.subr.mxu0 0.0
        %410 = vmatpush1.msra.mxu0 0.0
        %411 = vmatprep.subr.mxu0 0.0
        %412 = vmatpush1.msra.mxu0 0.0
        %413 = vmatprep.subr.mxu0 0.0
        %414 = vmatpush1.msra.mxu0 0.0
        %415 = vmatprep.subr.mxu0 0.0
        %416 = vmatpush1.msra.mxu0 0.0
        %417 = vmatprep.subr.mxu0 0.0
        %418 = vmatpush1.msra.mxu0 0.0
        %419 = vmatprep.subr.mxu0 0.0
        %420 = vmatpush1.msra.mxu0 0.0
        %421 = vmatprep.subr.mxu0 0.0
        %422 = vmatpush1.msra.mxu0 0.0
        %423 = vmatprep.subr.mxu0 0.0
        %424 = vmatpush1.msra.mxu0 0.0
        %425 = vmatprep.subr.mxu0 0.0
        %426 = vmatpush1.msra.mxu0 0.0
        %427 = vmatprep.subr.mxu0 0.0
        %428 = vmatpush1.msra.mxu0 0.0
        %429 = vmatprep.subr.mxu0 0.0
        %430 = vmatpush1.msra.mxu0 0.0
        %431 = vmatprep.subr.mxu0 0.0
        %432 = vmatpush1.msra.mxu0 0.0
        %433 = vmatprep.subr.mxu0 0.0
        %434 = vmatpush1.msra.mxu0 0.0
        %435 = vmatprep.subr.mxu0 0.0
        %436 = vmatpush1.msra.mxu0 0.0
        %437 = vmatprep.subr.mxu0 0.0
        %438 = vmatpush1.msra.mxu0 0.0
        %439 = vmatprep.subr.mxu0 0.0
        %440 = vmatpush1.msra.mxu0 0.0
        %441 = vmatprep.subr.mxu0 0.0
        %442 = vmatpush1.msra.mxu0 0.0
        %443 = vmatprep.subr.mxu0 0.0
        %444 = vmatpush1.msra.mxu0 0.0
        %445 = vmatprep.subr.mxu0 0.0
        %446 = vmatpush1.msra.mxu0 0.0
        %447 = vmatprep.subr.mxu0 0.0
        %448 = vmatpush1.msra.mxu0 0.0
        %449 = vmatprep.subr.mxu0 0.0
        %450 = vmatpush1.msra.mxu0 0.0
        %451 = vmatprep.subr.mxu0 0.0
        %452 = vmatpush1.msra.mxu0 0.0
        %453 = vmatprep.mubr.f32.mxu0 0.0
        %454 = vmatmul.mubr.f32.gmra.mrb[0].mxu0 %v383
        %v455 = vpop.f32.mrb[0].mxu0
        %v456 = vadd.f32 %v379, %v455
        %v457 = vpop.f32.mrb[0].mxu0
        %458 = vdwg.mxu0
        %v459 = vmax.f32 %v456, 0.0
        %v460 = vld [vmem:[#allocation2] sm:$0xff]
        %v461 = vld [vmem:[#allocation2 + $0x8] sm:$0xff]
        %v462 = vld [vmem:[#allocation2 + $0x10] sm:$0xff]
        %v463 = vld [vmem:[#allocation2 + $0x18] sm:$0xff]
        %v464 = vld [vmem:[#allocation2 + $0x20] sm:$0xff]
        %v465 = vld [vmem:[#allocation2 + $0x28] sm:$0xff]
        %v466 = vld [vmem:[#allocation2 + $0x30] sm:$0xff]
        %v467 = vld [vmem:[#allocation2 + $0x38] sm:$0xff]
        %v468 = vld [vmem:[#allocation2 + $0x40] sm:$0xff]
        %v469 = vld [vmem:[#allocation2 + $0x48] sm:$0xff]
        %v470 = vld [vmem:[#allocation2 + $0x50] sm:$0xff]
        %v471 = vld [vmem:[#allocation2 + $0x58] sm:$0xff]
        %v472 = vld [vmem:[#allocation2 + $0x60] sm:$0xff]
        %v473 = vld [vmem:[#allocation2 + $0x68] sm:$0xff]
        %v474 = vld [vmem:[#allocation2 + $0x70] sm:$0xff]
        %v475 = vld [vmem:[#allocation2 + $0x78] sm:$0xff]
        %v476 = vld [vmem:[%s4] sm:$0x1]
        %v478 = vlaneseq
        %v479 = vshrl.u32 %v478, 7
        %v480 = vsub.s32 0, %v479
        %v481 = vrot.slane %v476, %v480
        %483 = vmatprep.subr.mxu0 0.0
        %484 = vmatpush1.msra.mxu0 %v460
        %485 = vmatprep.subr.mxu0 0.0
        %486 = vmatpush1.msra.mxu0 %v461
        %487 = vmatprep.subr.mxu0 0.0
        %488 = vmatpush1.msra.mxu0 %v462
        %489 = vmatprep.subr.mxu0 0.0
        %490 = vmatpush1.msra.mxu0 %v463
        %491 = vmatprep.subr.mxu0 0.0
        %492 = vmatpush1.msra.mxu0 %v464
        %493 = vmatprep.subr.mxu0 0.0
        %494 = vmatpush1.msra.mxu0 %v465
        %495 = vmatprep.subr.mxu0 0.0
        %496 = vmatpush1.msra.mxu0 %v466
        %497 = vmatprep.subr.mxu0 0.0
        %498 = vmatpush1.msra.mxu0 %v467
        %499 = vmatprep.subr.mxu0 0.0
        %500 = vmatpush1.msra.mxu0 %v468
        %501 = vmatprep.subr.mxu0 0.0
        %502 = vmatpush1.msra.mxu0 %v469
        %503 = vmatprep.subr.mxu0 0.0
        %504 = vmatpush1.msra.mxu0 %v470
        %505 = vmatprep.subr.mxu0 0.0
        %506 = vmatpush1.msra.mxu0 %v471
        %507 = vmatprep.subr.mxu0 0.0
        %508 = vmatpush1.msra.mxu0 %v472
        %509 = vmatprep.subr.mxu0 0.0
        %510 = vmatpush1.msra.mxu0 %v473
        %511 = vmatprep.subr.mxu0 0.0
        %512 = vmatpush1.msra.mxu0 %v474
        %513 = vmatprep.subr.mxu0 0.0
        %514 = vmatpush1.msra.mxu0 %v475
        %515 = vmatprep.subr.mxu0 0.0
        %516 = vmatpush1.msra.mxu0 0.0
        %517 = vmatprep.subr.mxu0 0.0
        %518 = vmatpush1.msra.mxu0 0.0
        %519 = vmatprep.subr.mxu0 0.0
        %520 = vmatpush1.msra.mxu0 0.0
        %521 = vmatprep.subr.mxu0 0.0
        %522 = vmatpush1.msra.mxu0 0.0
        %523 = vmatprep.subr.mxu0 0.0
        %524 = vmatpush1.msra.mxu0 0.0
        %525 = vmatprep.subr.mxu0 0.0
        %526 = vmatpush1.msra.mxu0 0.0
        %527 = vmatprep.subr.mxu0 0.0
        %528 = vmatpush1.msra.mxu0 0.0
        %529 = vmatprep.subr.mxu0 0.0
        %530 = vmatpush1.msra.mxu0 0.0
        %531 = vmatprep.subr.mxu0 0.0
        %532 = vmatpush1.msra.mxu0 0.0
        %533 = vmatprep.subr.mxu0 0.0
        %534 = vmatpush1.msra.mxu0 0.0
        %535 = vmatprep.subr.mxu0 0.0
        %536 = vmatpush1.msra.mxu0 0.0
        %537 = vmatprep.subr.mxu0 0.0
        %538 = vmatpush1.msra.mxu0 0.0
        %539 = vmatprep.subr.mxu0 0.0
        %540 = vmatpush1.msra.mxu0 0.0
        %541 = vmatprep.subr.mxu0 0.0
        %542 = vmatpush1.msra.mxu0 0.0
        %543 = vmatprep.subr.mxu0 0.0
        %544 = vmatpush1.msra.mxu0 0.0
        %545 = vmatprep.subr.mxu0 0.0
        %546 = vmatpush1.msra.mxu0 0.0
        %547 = vmatprep.mubr.f32.mxu0 0.0
        %548 = vmatmul.mubr.f32.gmra.mrb[0].mxu0 %v459
        %v549 = vpop.f32.mrb[0].mxu0
        %v550 = vadd.f32 %v481, %v549
        %v551 = vpop.f32.mrb[0].mxu0
        %552 = vdwg.mxu0
        %v553 = vmax.f32 %v550, 0.0
        %v554 = vld [vmem:[#allocation5] sm:$0xff]
        %v555 = vld [vmem:[#allocation5 + $0x8] sm:$0xff]
        %v556 = vld [vmem:[#allocation5 + $0x10] sm:$0xff]
        %v557 = vld [vmem:[#allocation5 + $0x18] sm:$0xff]
        %v558 = vld [vmem:[#allocation5 + $0x20] sm:$0xff]
        %v559 = vld [vmem:[#allocation5 + $0x28] sm:$0xff]
        %v560 = vld [vmem:[#allocation5 + $0x30] sm:$0xff]
        %v561 = vld [vmem:[#allocation5 + $0x38] sm:$0xff]
        %v562 = vld [vmem:[#allocation5 + $0x40] sm:$0xff]
        %v563 = vld [vmem:[#allocation5 + $0x48] sm:$0xff]
        %v564 = vld [vmem:[#allocation5 + $0x50] sm:$0xff]
        %v565 = vld [vmem:[#allocation5 + $0x58] sm:$0xff]
        %v566 = vld [vmem:[#allocation5 + $0x60] sm:$0xff]
        %v567 = vld [vmem:[#allocation5 + $0x68] sm:$0xff]
        %v568 = vld [vmem:[#allocation5 + $0x70] sm:$0xff]
        %v569 = vld [vmem:[#allocation5 + $0x78] sm:$0xff]
        %v570 = vld [vmem:[%s6] sm:$0x1]
        %v572 = vlaneseq
        %v573 = vshrl.u32 %v572, 7
        %v574 = vsub.s32 0, %v573
        %v575 = vrot.slane %v570, %v574
        %577 = vmatprep.subr.mxu0 0.0
        %578 = vmatpush1.msra.mxu0 %v554
        %579 = vmatprep.subr.mxu0 0.0
        %580 = vmatpush1.msra.mxu0 %v555
        %581 = vmatprep.subr.mxu0 0.0
        %582 = vmatpush1.msra.mxu0 %v556
        %583 = vmatprep.subr.mxu0 0.0
        %584 = vmatpush1.msra.mxu0 %v557
        %585 = vmatprep.subr.mxu0 0.0
        %586 = vmatpush1.msra.mxu0 %v558
        %587 = vmatprep.subr.mxu0 0.0
        %588 = vmatpush1.msra.mxu0 %v559
        %589 = vmatprep.subr.mxu0 0.0
        %590 = vmatpush1.msra.mxu0 %v560
        %591 = vmatprep.subr.mxu0 0.0
        %592 = vmatpush1.msra.mxu0 %v561
        %593 = vmatprep.subr.mxu0 0.0
        %594 = vmatpush1.msra.mxu0 %v562
        %595 = vmatprep.subr.mxu0 0.0
        %596 = vmatpush1.msra.mxu0 %v563
        %597 = vmatprep.subr.mxu0 0.0
        %598 = vmatpush1.msra.mxu0 %v564
        %599 = vmatprep.subr.mxu0 0.0
        %600 = vmatpush1.msra.mxu0 %v565
        %601 = vmatprep.subr.mxu0 0.0
        %602 = vmatpush1.msra.mxu0 %v566
        %603 = vmatprep.subr.mxu0 0.0
        %604 = vmatpush1.msra.mxu0 %v567
        %605 = vmatprep.subr.mxu0 0.0
        %606 = vmatpush1.msra.mxu0 %v568
        %607 = vmatprep.subr.mxu0 0.0
        %608 = vmatpush1.msra.mxu0 %v569
        %609 = vmatprep.subr.mxu0 0.0
        %610 = vmatpush1.msra.mxu0 0.0
        %611 = vmatprep.subr.mxu0 0.0
        %612 = vmatpush1.msra.mxu0 0.0
        %613 = vmatprep.subr.mxu0 0.0
        %614 = vmatpush1.msra.mxu0 0.0
        %615 = vmatprep.subr.mxu0 0.0
        %616 = vmatpush1.msra.mxu0 0.0
        %617 = vmatprep.subr.mxu0 0.0
        %618 = vmatpush1.msra.mxu0 0.0
        %619 = vmatprep.subr.mxu0 0.0
        %620 = vmatpush1.msra.mxu0 0.0
        %621 = vmatprep.subr.mxu0 0.0
        %622 = vmatpush1.msra.mxu0 0.0
        %623 = vmatprep.subr.mxu0 0.0
        %624 = vmatpush1.msra.mxu0 0.0
        %625 = vmatprep.subr.mxu0 0.0
        %626 = vmatpush1.msra.mxu0 0.0
        %627 = vmatprep.subr.mxu0 0.0
        %628 = vmatpush1.msra.mxu0 0.0
        %629 = vmatprep.subr.mxu0 0.0
        %630 = vmatpush1.msra.mxu0 0.0
        %631 = vmatprep.subr.mxu0 0.0
        %632 = vmatpush1.msra.mxu0 0.0
        %633 = vmatprep.subr.mxu0 0.0
        %634 = vmatpush1.msra.mxu0 0.0
        %635 = vmatprep.subr.mxu0 0.0
        %636 = vmatpush1.msra.mxu0 0.0
        %637 = vmatprep.subr.mxu0 0.0
        %638 = vmatpush1.msra.mxu0 0.0
        %639 = vmatprep.subr.mxu0 0.0
        %640 = vmatpush1.msra.mxu0 0.0
        %641 = vmatprep.mubr.f32.mxu0 0.0
        %642 = vmatmul.mubr.f32.gmra.mrb[0].mxu0 %v553
        %v643 = vpop.f32.mrb[0].mxu0
        %v644 = vadd.f32 %v575, %v643
        %v645 = vpop.f32.mrb[0].mxu0
        %646 = vdwg.mxu0
        %v647 = vmax.f32 %v644, 0.0
        %v648 = vld [vmem:[#allocation7] sm:$0xff]
        %v649 = vld [vmem:[#allocation7 + $0x8] sm:$0xff]
        %v650 = vld [vmem:[#allocation7 + $0x10] sm:$0xff]
        %v651 = vld [vmem:[#allocation7 + $0x18] sm:$0xff]
        %v652 = vld [vmem:[#allocation7 + $0x20] sm:$0xff]
        %v653 = vld [vmem:[#allocation7 + $0x28] sm:$0xff]
        %v654 = vld [vmem:[#allocation7 + $0x30] sm:$0xff]
        %v655 = vld [vmem:[#allocation7 + $0x38] sm:$0xff]
        %v656 = vld [vmem:[#allocation7 + $0x40] sm:$0xff]
        %v657 = vld [vmem:[#allocation7 + $0x48] sm:$0xff]
        %v658 = vld [vmem:[#allocation7 + $0x50] sm:$0xff]
        %v659 = vld [vmem:[#allocation7 + $0x58] sm:$0xff]
        %v660 = vld [vmem:[#allocation7 + $0x60] sm:$0xff]
        %v661 = vld [vmem:[#allocation7 + $0x68] sm:$0xff]
        %v662 = vld [vmem:[#allocation7 + $0x70] sm:$0xff]
        %v663 = vld [vmem:[#allocation7 + $0x78] sm:$0xff]
        %v664 = vld [vmem:[%s8] sm:$0x1]
        %v666 = vlaneseq
        %v667 = vshrl.u32 %v666, 7
        %v668 = vsub.s32 0, %v667
        %v669 = vrot.slane %v664, %v668
        %671 = vmatprep.subr.mxu0 0.0
        %672 = vmatpush1.msra.mxu0 %v648
        %673 = vmatprep.subr.mxu0 0.0
        %674 = vmatpush1.msra.mxu0 %v649
        %675 = vmatprep.subr.mxu0 0.0
        %676 = vmatpush1.msra.mxu0 %v650
        %677 = vmatprep.subr.mxu0 0.0
        %678 = vmatpush1.msra.mxu0 %v651
        %679 = vmatprep.subr.mxu0 0.0
        %680 = vmatpush1.msra.mxu0 %v652
        %681 = vmatprep.subr.mxu0 0.0
        %682 = vmatpush1.msra.mxu0 %v653
        %683 = vmatprep.subr.mxu0 0.0
        %684 = vmatpush1.msra.mxu0 %v654
        %685 = vmatprep.subr.mxu0 0.0
        %686 = vmatpush1.msra.mxu0 %v655
        %687 = vmatprep.subr.mxu0 0.0
        %688 = vmatpush1.msra.mxu0 %v656
        %689 = vmatprep.subr.mxu0 0.0
        %690 = vmatpush1.msra.mxu0 %v657
        %691 = vmatprep.subr.mxu0 0.0
        %692 = vmatpush1.msra.mxu0 %v658
        %693 = vmatprep.subr.mxu0 0.0
        %694 = vmatpush1.msra.mxu0 %v659
        %695 = vmatprep.subr.mxu0 0.0
        %696 = vmatpush1.msra.mxu0 %v660
        %697 = vmatprep.subr.mxu0 0.0
        %698 = vmatpush1.msra.mxu0 %v661
        %699 = vmatprep.subr.mxu0 0.0
        %700 = vmatpush1.msra.mxu0 %v662
        %701 = vmatprep.subr.mxu0 0.0
        %702 = vmatpush1.msra.mxu0 %v663
        %703 = vmatprep.subr.mxu0 0.0
        %704 = vmatpush1.msra.mxu0 0.0
        %705 = vmatprep.subr.mxu0 0.0
        %706 = vmatpush1.msra.mxu0 0.0
        %707 = vmatprep.subr.mxu0 0.0
        %708 = vmatpush1.msra.mxu0 0.0
        %709 = vmatprep.subr.mxu0 0.0
        %710 = vmatpush1.msra.mxu0 0.0
        %711 = vmatprep.subr.mxu0 0.0
        %712 = vmatpush1.msra.mxu0 0.0
        %713 = vmatprep.subr.mxu0 0.0
        %714 = vmatpush1.msra.mxu0 0.0
        %715 = vmatprep.subr.mxu0 0.0
        %716 = vmatpush1.msra.mxu0 0.0
        %717 = vmatprep.subr.mxu0 0.0
        %718 = vmatpush1.msra.mxu0 0.0
        %719 = vmatprep.subr.mxu0 0.0
        %720 = vmatpush1.msra.mxu0 0.0
        %721 = vmatprep.subr.mxu0 0.0
        %722 = vmatpush1.msra.mxu0 0.0
        %723 = vmatprep.subr.mxu0 0.0
        %724 = vmatpush1.msra.mxu0 0.0
        %725 = vmatprep.subr.mxu0 0.0
        %726 = vmatpush1.msra.mxu0 0.0
        %727 = vmatprep.subr.mxu0 0.0
        %728 = vmatpush1.msra.mxu0 0.0
        %729 = vmatprep.subr.mxu0 0.0
        %730 = vmatpush1.msra.mxu0 0.0
        %731 = vmatprep.subr.mxu0 0.0
        %732 = vmatpush1.msra.mxu0 0.0
        %733 = vmatprep.subr.mxu0 0.0
        %734 = vmatpush1.msra.mxu0 0.0
        %735 = vmatprep.mubr.f32.mxu0 0.0
        %736 = vmatmul.mubr.f32.gmra.mrb[0].mxu0 %v647
        %v737 = vpop.f32.mrb[0].mxu0
        %v738 = vadd.f32 %v669, %v737
        %v739 = vpop.f32.mrb[0].mxu0
        %740 = vdwg.mxu0
        %741 = vst [vmem:[%s367] sm:$0xff] %v738
        %s742 = sand.u32 %s227, 1
        %s743 = scalar_lea.sflag [#allocation4], %s742
        %s744 = sand.u32 %s227, 1
        %s745 = smul.addr %s744, 8
        %s746 = scalar_lea.vmem [#allocation8], %s745
        // Predicated region
        $region69: #{tpu_custom_call.1} parent=55 // pred_check
          %p747 = pneg %p237
        $region70: #{tpu_custom_call.1} parent=55 // pred_check_branch
          %749 = sbr.rel (%p747) target = $region72
        $region71: #{tpu_custom_call.1} parent=55 // pred_region
          %s751 = ssub.s32 128, 128
          %752 = vsyncadd %s743, %s751
          %s753 = smul.addr %s25, 128
          %s754 = scalar_lea.hbm %s9, %s753
          %s756 = sshll.u32 %s746, 4
          %s757 = int_to_ptr.vmem [resolvable:$true] %s756
          %759 = dma.vmem_to_hbm [thread:$0]  %s757, 128, %s754, %s743
        $region72: #{tpu_custom_call.1} parent=55 // pred_fallthru
          _
      $region56: #{tpu_custom_call.1} parent=5 // pred_fallthru
        _
      %p760 = scmp.le.s32.totalorder 2, %s20
      // Predicated region
      $region73: #{tpu_custom_call.1} parent=5 // pred_check
        %p761 = pneg %p760
      $region74: #{tpu_custom_call.1} parent=5 // pred_check_branch
        %763 = sbr.rel (%p761) target = $region76
      $region75: #{tpu_custom_call.1} parent=5 // pred_region
        %s764 = ssub.s32 %s20, 2
        // Predicated region
        $region77: #{tpu_custom_call.1} parent=75 // pred_check
          %p765 = pneg %p243
        $region78: #{tpu_custom_call.1} parent=75 // pred_check_branch
          %767 = sbr.rel (%p765) target = $region80
        $region79: #{tpu_custom_call.1} parent=75 // pred_region
          %s768 = sand.u32 %s228, 1
          %s769 = scalar_lea.sflag [#allocation4], %s768
          %s770 = sand.u32 %s228, 1
          %s771 = smul.addr %s770, 8
          %s772 = scalar_lea.vmem [#allocation8], %s771
          %773 = dma.done %s769, 128
        $region80: #{tpu_custom_call.1} parent=75 // pred_fallthru
          _
      $region76: #{tpu_custom_call.1} parent=5 // pred_fallthru
        _
    $region6: #{tpu_custom_call.1} parent=1 // loop_footer
      %s24 = sadd.s32 1, %s20
    $region7: #{tpu_custom_call.1} parent=1 // loop_footer_branch
      %19 = sbr.rel target = $region3
    $region8: #{tpu_custom_call.1} parent=1 // loop_exit
      _
    %774 = vsyncpa [#allocation3], 1
    %s775 = scalar_lea.sflag [#allocation3], 1
    %776 = vsyncpa %s775, 1
    %777 = vsyncpa [#allocation6], 1
    %778 = vsyncpa [#allocation4], 1
    %s779 = scalar_lea.sflag [#allocation4], 1
    %780 = vsyncpa %s779, 1

</llo_original>
